<compile_context>
chip_gen: v5e
topology: v5e:2x2
jax: 0.10.0
libtpu: 0.0.40
codegen_flags: <defaults>
</compile_context>

<pallas_src>
import functools
import math

import jax
import jax.numpy as jnp
from jax.experimental import pallas as pl
from jax.experimental.pallas import tpu as pltpu


# --------------------------- Fused MHA kernel --------------------------------
def _mha_fused_kernel(xq_ref, xk_ref, xv_ref,
                      wq_ref, wk_ref, wv_ref,
                      bq_ref, bk_ref, bv_ref,
                      ctx_ref, attn_ref,
                      *, batch, num_heads, q_len, kv_len, scale):
    # xq: (B*q_len, D)   xk/xv: (B*kv_len, D)   w*: (D, D)   b*: (1, D)
    d_model = wq_ref.shape[1]
    d_head = d_model // num_heads

    # --- fused Q/K/V projections: full-width MXU matmuls, batch folded in M --
    q = jnp.dot(xq_ref[...], wq_ref[...],
                preferred_element_type=jnp.float32) + bq_ref[...]
    k = jnp.dot(xk_ref[...], wk_ref[...],
                preferred_element_type=jnp.float32) + bk_ref[...]
    v = jnp.dot(xv_ref[...], wv_ref[...],
                preferred_element_type=jnp.float32) + bv_ref[...]

    # scale q (B*q_len*D elements) instead of the larger score tensor
    q = q * scale

    # (B*L, D) -> (B, L, D): splits the sublane axis at a multiple of 8 (free)
    q = q.reshape(batch, q_len, d_model)
    k = k.reshape(batch, kv_len, d_model)
    v = v.reshape(batch, kv_len, d_model)

    # --- per-head attention; matmuls batched over the batch axis ------------
    for h in range(num_heads):                      # static unroll, H is small
        sl = slice(h * d_head, (h + 1) * d_head)    # static lane slice
        q_h = q[:, :, sl]                           # (B, q_len, d_head)
        k_h = k[:, :, sl]                           # (B, kv_len, d_head)
        v_h = v[:, :, sl]                           # (B, kv_len, d_head)

        # one batched MXU call per head (contract on d_head, no k^T copy)
        s = jnp.einsum("bqd,bkd->bqk", q_h, k_h,
                       preferred_element_type=jnp.float32)      # (B, q, kv)

        # numerically stable softmax; divide via EUP reciprocal (approx vrcp)
        m = jnp.max(s, axis=-1, keepdims=True)
        e = jnp.exp(s - m)
        denom = jnp.sum(e, axis=-1, keepdims=True)
        p = e * pl.reciprocal(denom, approx=True)                # (B, q, kv)

        # lane-dense attn store: flatten (q, kv) -> q*kv lanes, one row per b
        attn_ref[h] = p.reshape(batch, q_len * kv_len).astype(attn_ref.dtype)

        # context for this head; write its columns directly into the
        # VMEM-resident output block (no concatenate, single HBM writeback)
        ctx_h = jnp.einsum("bqk,bkd->bqd", p.astype(v_h.dtype), v_h,
                           preferred_element_type=jnp.float32)   # (B, q, dh)
        ctx_ref[:, sl] = ctx_h.reshape(batch * q_len,
                                       d_head).astype(ctx_ref.dtype)


# ------------------------------- Wrapper --------------------------------------
def multi_head_attention(params, query, key, value, num_heads, *,
                         attn_dtype=None):
    """context, attn = MHA(query, key, value) with x @ W + b linear convention."""
    B, q_len, d_model = query.shape
    kv_len = key.shape[1]
    assert value.shape[1] == kv_len
    assert d_model % num_heads == 0
    # keep the (B*L, D) <-> (B, L, D) reshapes layout-free (sublane multiples)
    assert q_len % 8 == 0 and kv_len % 8 == 0, \
        "demo kernel assumes q_len/kv_len multiples of 8"  # TODO(synk): pad path

    d_head = d_model // num_heads
    scale = 1.0 / math.sqrt(d_model)          # kospeech divides by sqrt(d_model)
    if attn_dtype is None:                    # pass jnp.bfloat16 to halve writeback
        attn_dtype = query.dtype

    # Host-side free reshapes: fold batch into rows, biases as (1, D)
    xq = query.reshape(B * q_len, d_model)
    xk = key.reshape(B * kv_len, d_model)
    xv = value.reshape(B * kv_len, d_model)
    bq = params["bq"].reshape(1, d_model)
    bk = params["bk"].reshape(1, d_model)
    bv = params["bv"].reshape(1, d_model)

    kernel = functools.partial(_mha_fused_kernel, batch=B, num_heads=num_heads,
                               q_len=q_len, kv_len=kv_len, scale=scale)

    # Advisory cost estimate + explicit VMEM budget (scoped defaults are small)
    flops = (2 * d_model * d_model * (B * q_len + 2 * B * kv_len)
             + 4 * B * num_heads * q_len * kv_len * d_head)
    transcendentals = B * num_heads * q_len * (kv_len + 1)       # exp + rcp
    io_bytes = (4 * (xq.size + xk.size + xv.size + 3 * d_model * d_model
                     + 3 * d_model + B * q_len * d_model)
                + jnp.dtype(attn_dtype).itemsize * num_heads * B * q_len * kv_len)
    vmem_limit = int(min(64 * 2**20, max(8 * 2**20, 8 * io_bytes)))

    ctx_flat, attn_flat = pl.pallas_call(
        kernel,
        out_shape=(
            jax.ShapeDtypeStruct((B * q_len, d_model), query.dtype),
            jax.ShapeDtypeStruct((num_heads, B, q_len * kv_len), attn_dtype),
        ),
        grid=(1,),   # single step: projections + all heads fused (single-TC v5e/v6e)
        in_specs=[
            pl.BlockSpec((B * q_len, d_model), lambda i: (0, 0)),
            pl.BlockSpec((B * kv_len, d_model), lambda i: (0, 0)),
            pl.BlockSpec((B * kv_len, d_model), lambda i: (0, 0)),
            pl.BlockSpec((d_model, d_model), lambda i: (0, 0)),   # wq (resident)
            pl.BlockSpec((d_model, d_model), lambda i: (0, 0)),   # wk
            pl.BlockSpec((d_model, d_model), lambda i: (0, 0)),   # wv
            pl.BlockSpec((1, d_model), lambda i: (0, 0)),         # bq
            pl.BlockSpec((1, d_model), lambda i: (0, 0)),         # bk
            pl.BlockSpec((1, d_model), lambda i: (0, 0)),         # bv
        ],
        out_specs=(
            pl.BlockSpec((B * q_len, d_model), lambda i: (0, 0)),
            pl.BlockSpec((num_heads, B, q_len * kv_len), lambda i: (0, 0, 0)),
        ),
        compiler_params=pltpu.CompilerParams(
            dimension_semantics=("arbitrary",),
            vmem_limit_bytes=vmem_limit,
        ),
        cost_estimate=pl.CostEstimate(flops=flops,
                                      transcendentals=transcendentals,
                                      bytes_accessed=io_bytes),
    )(xq, xk, xv, params["wq"], params["wk"], params["wv"], bq, bk, bv)

    # Host-side free reshapes back to the torch layouts:
    #   ctx  (B*q, D)        -> (B, q, D)
    #   attn (H, B, q*kv)    -> (H*B, q, kv)   (row index = h*B + b, as in
    #                                           torch permute(2,0,1,3).view)
    ctx = ctx_flat.reshape(B, q_len, d_model)
    attn = attn_flat.reshape(num_heads * B, q_len, kv_len)
    return ctx, attn


# ------------------------------ Reference (pure JAX) -------------------------
def _reference(params, query, key, value, num_heads):
    B, q_len, d_model = query.shape
    d_head = d_model // num_heads

    q = query @ params["wq"] + params["bq"]
    k = key @ params["wk"] + params["bk"]
    v = value @ params["wv"] + params["bv"]

    def to_heads(x):
        Bx, L, _ = x.shape
        x = x.reshape(Bx, L, num_heads, d_head)
        return jnp.transpose(x, (2, 0, 1, 3)).reshape(Bx * num_heads, L, d_head)

    qh, kh, vh = to_heads(q), to_heads(k), to_heads(v)
    score = jnp.einsum("bqd,bkd->bqk", qh, kh) / math.sqrt(d_model)
    attn = jax.nn.softmax(score, axis=-1)
    ctx = jnp.einsum("bqk,bkd->bqd", attn, vh)
    ctx = ctx.reshape(num_heads, B, q_len, d_head)
    ctx = jnp.transpose(ctx, (1, 2, 0, 3)).reshape(B, q_len, num_heads * d_head)
    return ctx, attn


# ------------------------------------ main ------------------------------------
if __name__ == "__main__":
    B, q_len, kv_len = 2, 8, 16
    d_model, num_heads = 32, 4

    root = jax.random.PRNGKey(0)
    keys = jax.random.split(root, 9)

    init = 1.0 / math.sqrt(d_model)
    params = {
        "wq": jax.random.uniform(keys[0], (d_model, d_model), jnp.float32, -init, init),
        "bq": jax.random.uniform(keys[1], (d_model,), jnp.float32, -init, init),
        "wk": jax.random.uniform(keys[2], (d_model, d_model), jnp.float32, -init, init),
        "bk": jax.random.uniform(keys[3], (d_model,), jnp.float32, -init, init),
        "wv": jax.random.uniform(keys[4], (d_model, d_model), jnp.float32, -init, init),
        "bv": jax.random.uniform(keys[5], (d_model,), jnp.float32, -init, init),
    }

    query = jax.random.normal(keys[6], (B, q_len, d_model), jnp.float32)
    key = jax.random.normal(keys[7], (B, kv_len, d_model), jnp.float32)
    value = jax.random.normal(keys[8], (B, kv_len, d_model), jnp.float32)

    ctx, attn = multi_head_attention(params, query, key, value, num_heads)
    ctx = jax.block_until_ready(ctx)
    attn = jax.block_until_ready(attn)

    ctx_ref, attn_ref = _reference(params, query, key, value, num_heads)
    assert ctx.shape == (B, q_len, d_model)
    assert attn.shape == (B * num_heads, q_len, kv_len)
    # tolerance loosened slightly for the approximate EUP reciprocal in softmax
    assert jnp.allclose(ctx, ctx_ref, atol=2e-3, rtol=2e-3), "context mismatch"
    assert jnp.allclose(attn, attn_ref, atol=2e-3, rtol=2e-3), "attn mismatch"

    print("KERNEL_OK")
</pallas_src>

<mosaic_0001>
module attributes {stable_mosaic.version = 11 : i64} {
  func.func @_mha_fused_kernel(%arg0: i32, %arg1: memref<16x32xf32, #tpu.memory_space<vmem>>, %arg2: memref<32x32xf32, #tpu.memory_space<vmem>>, %arg3: memref<32x32xf32, #tpu.memory_space<vmem>>, %arg4: memref<32x32xf32, #tpu.memory_space<vmem>>, %arg5: memref<32x32xf32, #tpu.memory_space<vmem>>, %arg6: memref<32x32xf32, #tpu.memory_space<vmem>>, %arg7: memref<1x32xf32, #tpu.memory_space<vmem>>, %arg8: memref<1x32xf32, #tpu.memory_space<vmem>>, %arg9: memref<1x32xf32, #tpu.memory_space<vmem>>, %arg10: memref<16x32xf32, #tpu.memory_space<vmem>>, %arg11: memref<4x2x128xf32, #tpu.memory_space<vmem>>) attributes {dimension_semantics = [#tpu.dimension_semantics<arbitrary>], iteration_bounds = array<i64: 1>, scalar_prefetch = 0 : i64, scratch_operands = 0 : i64, tpu.core_type = #tpu.core_type<tc>, window_params = [{pipeline_mode = #tpu.pipeline_mode<synchronous>, transform_indices = @transform_0, window_bounds = array<i64: 16, 32>}, {pipeline_mode = #tpu.pipeline_mode<synchronous>, transform_indices = @transform_1, window_bounds = array<i64: 32, 32>}, {pipeline_mode = #tpu.pipeline_mode<synchronous>, transform_indices = @transform_2, window_bounds = array<i64: 32, 32>}, {pipeline_mode = #tpu.pipeline_mode<synchronous>, transform_indices = @transform_3, window_bounds = array<i64: 32, 32>}, {pipeline_mode = #tpu.pipeline_mode<synchronous>, transform_indices = @transform_4, window_bounds = array<i64: 32, 32>}, {pipeline_mode = #tpu.pipeline_mode<synchronous>, transform_indices = @transform_5, window_bounds = array<i64: 32, 32>}, {pipeline_mode = #tpu.pipeline_mode<synchronous>, transform_indices = @transform_6, window_bounds = array<i64: 1, 32>}, {pipeline_mode = #tpu.pipeline_mode<synchronous>, transform_indices = @transform_7, window_bounds = array<i64: 1, 32>}, {pipeline_mode = #tpu.pipeline_mode<synchronous>, transform_indices = @transform_8, window_bounds = array<i64: 1, 32>}, {pipeline_mode = #tpu.pipeline_mode<synchronous>, transform_indices = @transform_9, window_bounds = array<i64: 16, 32>}, {pipeline_mode = #tpu.pipeline_mode<synchronous>, transform_indices = @transform_10, window_bounds = array<i64: 4, 2, 128>}]} {
    %c0 = arith.constant 0 : index
    %c0_0 = arith.constant 0 : index
    %0 = vector.load %arg1[%c0, %c0_0] : memref<16x32xf32, #tpu.memory_space<vmem>>, vector<16x32xf32>
    %c0_1 = arith.constant 0 : index
    %c0_2 = arith.constant 0 : index
    %1 = vector.load %arg4[%c0_1, %c0_2] : memref<32x32xf32, #tpu.memory_space<vmem>>, vector<32x32xf32>
    %cst = arith.constant dense<0.000000e+00> : vector<16x32xf32>
    %2 = tpu.matmul %0, %1, %cst {dimension_numbers = #tpu.dot_dimension_numbers<[1], [0], [0], [1], [0, 0, 1, 1], [], []>} : vector<16x32xf32>, vector<32x32xf32>, vector<16x32xf32> -> vector<16x32xf32>
    %c0_3 = arith.constant 0 : index
    %c0_4 = arith.constant 0 : index
    %3 = vector.load %arg7[%c0_3, %c0_4] : memref<1x32xf32, #tpu.memory_space<vmem>>, vector<1x32xf32>
    %4 = vector.broadcast %3 : vector<1x32xf32> to vector<16x32xf32>
    %5 = arith.addf %2, %4 : vector<16x32xf32>
    %c0_5 = arith.constant 0 : index
    %c0_6 = arith.constant 0 : index
    %6 = vector.load %arg2[%c0_5, %c0_6] : memref<32x32xf32, #tpu.memory_space<vmem>>, vector<32x32xf32>
    %c0_7 = arith.constant 0 : index
    %c0_8 = arith.constant 0 : index
    %7 = vector.load %arg5[%c0_7, %c0_8] : memref<32x32xf32, #tpu.memory_space<vmem>>, vector<32x32xf32>
    %cst_9 = arith.constant dense<0.000000e+00> : vector<32x32xf32>
    %8 = tpu.matmul %6, %7, %cst_9 {dimension_numbers = #tpu.dot_dimension_numbers<[1], [0], [0], [1], [0, 0, 1, 1], [], []>} : vector<32x32xf32>, vector<32x32xf32>, vector<32x32xf32> -> vector<32x32xf32>
    %c0_10 = arith.constant 0 : index
    %c0_11 = arith.constant 0 : index
    %9 = vector.load %arg8[%c0_10, %c0_11] : memref<1x32xf32, #tpu.memory_space<vmem>>, vector<1x32xf32>
    %10 = vector.broadcast %9 : vector<1x32xf32> to vector<32x32xf32>
    %11 = arith.addf %8, %10 : vector<32x32xf32>
    %c0_12 = arith.constant 0 : index
    %c0_13 = arith.constant 0 : index
    %12 = vector.load %arg3[%c0_12, %c0_13] : memref<32x32xf32, #tpu.memory_space<vmem>>, vector<32x32xf32>
    %c0_14 = arith.constant 0 : index
    %c0_15 = arith.constant 0 : index
    %13 = vector.load %arg6[%c0_14, %c0_15] : memref<32x32xf32, #tpu.memory_space<vmem>>, vector<32x32xf32>
    %cst_16 = arith.constant dense<0.000000e+00> : vector<32x32xf32>
    %14 = tpu.matmul %12, %13, %cst_16 {dimension_numbers = #tpu.dot_dimension_numbers<[1], [0], [0], [1], [0, 0, 1, 1], [], []>} : vector<32x32xf32>, vector<32x32xf32>, vector<32x32xf32> -> vector<32x32xf32>
    %c0_17 = arith.constant 0 : index
    %c0_18 = arith.constant 0 : index
    %15 = vector.load %arg9[%c0_17, %c0_18] : memref<1x32xf32, #tpu.memory_space<vmem>>, vector<1x32xf32>
    %16 = vector.broadcast %15 : vector<1x32xf32> to vector<32x32xf32>
    %17 = arith.addf %14, %16 : vector<32x32xf32>
    %cst_19 = arith.constant 0.176776692 : f32
    %18 = vector.broadcast %cst_19 : f32 to vector<16x32xf32>
    %19 = arith.mulf %5, %18 : vector<16x32xf32>
    %20 = vector.shape_cast %19 : vector<16x32xf32> to vector<2x8x32xf32>
    %21 = vector.shape_cast %11 : vector<32x32xf32> to vector<2x16x32xf32>
    %22 = vector.shape_cast %17 : vector<32x32xf32> to vector<2x16x32xf32>
    %23 = vector.extract_strided_slice %20 {offsets = [0, 0, 0], sizes = [2, 8, 8], strides = [1, 1, 1]} : vector<2x8x32xf32> to vector<2x8x8xf32>
    %24 = vector.extract_strided_slice %21 {offsets = [0, 0, 0], sizes = [2, 16, 8], strides = [1, 1, 1]} : vector<2x16x32xf32> to vector<2x16x8xf32>
    %25 = vector.extract_strided_slice %22 {offsets = [0, 0, 0], sizes = [2, 16, 8], strides = [1, 1, 1]} : vector<2x16x32xf32> to vector<2x16x8xf32>
    "tpu.trace_start"() <{level = 10 : i32, message = "bqd,bkd->bqk"}> : () -> ()
    %cst_20 = arith.constant dense<0.000000e+00> : vector<2x8x16xf32>
    %26 = tpu.matmul %23, %24, %cst_20 {dimension_numbers = #tpu.dot_dimension_numbers<[2], [2], [1], [1], [0, 0, 0, 1, 1, 1], [0], [0]>} : vector<2x8x8xf32>, vector<2x16x8xf32>, vector<2x8x16xf32> -> vector<2x8x16xf32>
    "tpu.trace_stop"() : () -> ()
    %cst_21 = arith.constant dense<0xFF800000> : vector<2x8xf32>
    %27 = vector.multi_reduction <maximumf>, %26, %cst_21 [2] : vector<2x8x16xf32> to vector<2x8xf32>
    %28 = vector.shape_cast %27 : vector<2x8xf32> to vector<2x8x1xf32>
    %29 = vector.broadcast %28 : vector<2x8x1xf32> to vector<2x8x16xf32>
    %30 = arith.subf %26, %29 : vector<2x8x16xf32>
    %31 = math.exp %30 : vector<2x8x16xf32>
    %cst_22 = arith.constant dense<0.000000e+00> : vector<2x8xf32>
    %32 = vector.multi_reduction <add>, %31, %cst_22 [2] : vector<2x8x16xf32> to vector<2x8xf32>
    %33 = vector.shape_cast %32 : vector<2x8xf32> to vector<2x8x1xf32>
    %34 = tpu.reciprocal %33 {approx = true} : vector<2x8x1xf32> -> vector<2x8x1xf32>
    %35 = vector.broadcast %34 : vector<2x8x1xf32> to vector<2x8x16xf32>
    %36 = arith.mulf %31, %35 : vector<2x8x16xf32>
    %37 = vector.shape_cast %36 : vector<2x8x16xf32> to vector<2x128xf32>
    %c0_23 = arith.constant 0 : index
    %c0_24 = arith.constant 0 : index
    %c0_25 = arith.constant 0 : index
    %38 = vector.load %arg11[%c0_23, %c0_24, %c0_25] : memref<4x2x128xf32, #tpu.memory_space<vmem>>, vector<1x2x128xf32>
    %39 = vector.shape_cast %38 : vector<1x2x128xf32> to vector<2x128xf32>
    %40 = vector.shape_cast %37 : vector<2x128xf32> to vector<1x2x128xf32>
    tpu.vector_store %arg11[%c0_23, %c0_24, %c0_25], %40 {strides = array<i32>} : memref<4x2x128xf32, #tpu.memory_space<vmem>>, vector<1x2x128xf32>,
    "tpu.trace_start"() <{level = 10 : i32, message = "bqk,bkd->bqd"}> : () -> ()
    %cst_26 = arith.constant dense<0.000000e+00> : vector<2x8x8xf32>
    %41 = tpu.matmul %36, %25, %cst_26 {dimension_numbers = #tpu.dot_dimension_numbers<[2], [1], [1], [2], [0, 0, 0, 1, 1, 2], [0], [0]>} : vector<2x8x16xf32>, vector<2x16x8xf32>, vector<2x8x8xf32> -> vector<2x8x8xf32>
    "tpu.trace_stop"() : () -> ()
    %42 = vector.shape_cast %41 : vector<2x8x8xf32> to vector<16x8xf32>
    %c0_27 = arith.constant 0 : index
    %c0_28 = arith.constant 0 : index
    %43 = vector.load %arg10[%c0_27, %c0_28] : memref<16x32xf32, #tpu.memory_space<vmem>>, vector<16x8xf32>
    tpu.vector_store %arg10[%c0_27, %c0_28], %42 {strides = array<i32>} : memref<16x32xf32, #tpu.memory_space<vmem>>, vector<16x8xf32>,
    %44 = vector.extract_strided_slice %20 {offsets = [0, 0, 8], sizes = [2, 8, 8], strides = [1, 1, 1]} : vector<2x8x32xf32> to vector<2x8x8xf32>
    %45 = vector.extract_strided_slice %21 {offsets = [0, 0, 8], sizes = [2, 16, 8], strides = [1, 1, 1]} : vector<2x16x32xf32> to vector<2x16x8xf32>
    %46 = vector.extract_strided_slice %22 {offsets = [0, 0, 8], sizes = [2, 16, 8], strides = [1, 1, 1]} : vector<2x16x32xf32> to vector<2x16x8xf32>
    "tpu.trace_start"() <{level = 10 : i32, message = "bqd,bkd->bqk"}> : () -> ()
    %cst_29 = arith.constant dense<0.000000e+00> : vector<2x8x16xf32>
    %47 = tpu.matmul %44, %45, %cst_29 {dimension_numbers = #tpu.dot_dimension_numbers<[2], [2], [1], [1], [0, 0, 0, 1, 1, 1], [0], [0]>} : vector<2x8x8xf32>, vector<2x16x8xf32>, vector<2x8x16xf32> -> vector<2x8x16xf32>
    "tpu.trace_stop"() : () -> ()
    %cst_30 = arith.constant dense<0xFF800000> : vector<2x8xf32>
    %48 = vector.multi_reduction <maximumf>, %47, %cst_30 [2] : vector<2x8x16xf32> to vector<2x8xf32>
    %49 = vector.shape_cast %48 : vector<2x8xf32> to vector<2x8x1xf32>
    %50 = vector.broadcast %49 : vector<2x8x1xf32> to vector<2x8x16xf32>
    %51 = arith.subf %47, %50 : vector<2x8x16xf32>
    %52 = math.exp %51 : vector<2x8x16xf32>
    %cst_31 = arith.constant dense<0.000000e+00> : vector<2x8xf32>
    %53 = vector.multi_reduction <add>, %52, %cst_31 [2] : vector<2x8x16xf32> to vector<2x8xf32>
    %54 = vector.shape_cast %53 : vector<2x8xf32> to vector<2x8x1xf32>
    %55 = tpu.reciprocal %54 {approx = true} : vector<2x8x1xf32> -> vector<2x8x1xf32>
    %56 = vector.broadcast %55 : vector<2x8x1xf32> to vector<2x8x16xf32>
    %57 = arith.mulf %52, %56 : vector<2x8x16xf32>
    %58 = vector.shape_cast %57 : vector<2x8x16xf32> to vector<2x128xf32>
    %c1 = arith.constant 1 : index
    %c0_32 = arith.constant 0 : index
    %c0_33 = arith.constant 0 : index
    %59 = vector.load %arg11[%c1, %c0_32, %c0_33] : memref<4x2x128xf32, #tpu.memory_space<vmem>>, vector<1x2x128xf32>
    %60 = vector.shape_cast %59 : vector<1x2x128xf32> to vector<2x128xf32>
    %61 = vector.shape_cast %58 : vector<2x128xf32> to vector<1x2x128xf32>
    tpu.vector_store %arg11[%c1, %c0_32, %c0_33], %61 {strides = array<i32>} : memref<4x2x128xf32, #tpu.memory_space<vmem>>, vector<1x2x128xf32>,
    "tpu.trace_start"() <{level = 10 : i32, message = "bqk,bkd->bqd"}> : () -> ()
    %cst_34 = arith.constant dense<0.000000e+00> : vector<2x8x8xf32>
    %62 = tpu.matmul %57, %46, %cst_34 {dimension_numbers = #tpu.dot_dimension_numbers<[2], [1], [1], [2], [0, 0, 0, 1, 1, 2], [0], [0]>} : vector<2x8x16xf32>, vector<2x16x8xf32>, vector<2x8x8xf32> -> vector<2x8x8xf32>
    "tpu.trace_stop"() : () -> ()
    %63 = vector.shape_cast %62 : vector<2x8x8xf32> to vector<16x8xf32>
    %c0_35 = arith.constant 0 : index
    %c8 = arith.constant 8 : index
    %64 = vector.load %arg10[%c0_35, %c8] : memref<16x32xf32, #tpu.memory_space<vmem>>, vector<16x8xf32>
    tpu.vector_store %arg10[%c0_35, %c8], %63 {strides = array<i32>} : memref<16x32xf32, #tpu.memory_space<vmem>>, vector<16x8xf32>,
    %65 = vector.extract_strided_slice %20 {offsets = [0, 0, 16], sizes = [2, 8, 8], strides = [1, 1, 1]} : vector<2x8x32xf32> to vector<2x8x8xf32>
    %66 = vector.extract_strided_slice %21 {offsets = [0, 0, 16], sizes = [2, 16, 8], strides = [1, 1, 1]} : vector<2x16x32xf32> to vector<2x16x8xf32>
    %67 = vector.extract_strided_slice %22 {offsets = [0, 0, 16], sizes = [2, 16, 8], strides = [1, 1, 1]} : vector<2x16x32xf32> to vector<2x16x8xf32>
    "tpu.trace_start"() <{level = 10 : i32, message = "bqd,bkd->bqk"}> : () -> ()
    %cst_36 = arith.constant dense<0.000000e+00> : vector<2x8x16xf32>
    %68 = tpu.matmul %65, %66, %cst_36 {dimension_numbers = #tpu.dot_dimension_numbers<[2], [2], [1], [1], [0, 0, 0, 1, 1, 1], [0], [0]>} : vector<2x8x8xf32>, vector<2x16x8xf32>, vector<2x8x16xf32> -> vector<2x8x16xf32>
    "tpu.trace_stop"() : () -> ()
    %cst_37 = arith.constant dense<0xFF800000> : vector<2x8xf32>
    %69 = vector.multi_reduction <maximumf>, %68, %cst_37 [2] : vector<2x8x16xf32> to vector<2x8xf32>
    %70 = vector.shape_cast %69 : vector<2x8xf32> to vector<2x8x1xf32>
    %71 = vector.broadcast %70 : vector<2x8x1xf32> to vector<2x8x16xf32>
    %72 = arith.subf %68, %71 : vector<2x8x16xf32>
    %73 = math.exp %72 : vector<2x8x16xf32>
    %cst_38 = arith.constant dense<0.000000e+00> : vector<2x8xf32>
    %74 = vector.multi_reduction <add>, %73, %cst_38 [2] : vector<2x8x16xf32> to vector<2x8xf32>
    %75 = vector.shape_cast %74 : vector<2x8xf32> to vector<2x8x1xf32>
    %76 = tpu.reciprocal %75 {approx = true} : vector<2x8x1xf32> -> vector<2x8x1xf32>
    %77 = vector.broadcast %76 : vector<2x8x1xf32> to vector<2x8x16xf32>
    %78 = arith.mulf %73, %77 : vector<2x8x16xf32>
    %79 = vector.shape_cast %78 : vector<2x8x16xf32> to vector<2x128xf32>
    %c2 = arith.constant 2 : index
    %c0_39 = arith.constant 0 : index
    %c0_40 = arith.constant 0 : index
    %80 = vector.load %arg11[%c2, %c0_39, %c0_40] : memref<4x2x128xf32, #tpu.memory_space<vmem>>, vector<1x2x128xf32>
    %81 = vector.shape_cast %80 : vector<1x2x128xf32> to vector<2x128xf32>
    %82 = vector.shape_cast %79 : vector<2x128xf32> to vector<1x2x128xf32>
    tpu.vector_store %arg11[%c2, %c0_39, %c0_40], %82 {strides = array<i32>} : memref<4x2x128xf32, #tpu.memory_space<vmem>>, vector<1x2x128xf32>,
    "tpu.trace_start"() <{level = 10 : i32, message = "bqk,bkd->bqd"}> : () -> ()
    %cst_41 = arith.constant dense<0.000000e+00> : vector<2x8x8xf32>
    %83 = tpu.matmul %78, %67, %cst_41 {dimension_numbers = #tpu.dot_dimension_numbers<[2], [1], [1], [2], [0, 0, 0, 1, 1, 2], [0], [0]>} : vector<2x8x16xf32>, vector<2x16x8xf32>, vector<2x8x8xf32> -> vector<2x8x8xf32>
    "tpu.trace_stop"() : () -> ()
    %84 = vector.shape_cast %83 : vector<2x8x8xf32> to vector<16x8xf32>
    %c0_42 = arith.constant 0 : index
    %c16 = arith.constant 16 : index
    %85 = vector.load %arg10[%c0_42, %c16] : memref<16x32xf32, #tpu.memory_space<vmem>>, vector<16x8xf32>
    tpu.vector_store %arg10[%c0_42, %c16], %84 {strides = array<i32>} : memref<16x32xf32, #tpu.memory_space<vmem>>, vector<16x8xf32>,
    %86 = vector.extract_strided_slice %20 {offsets = [0, 0, 24], sizes = [2, 8, 8], strides = [1, 1, 1]} : vector<2x8x32xf32> to vector<2x8x8xf32>
    %87 = vector.extract_strided_slice %21 {offsets = [0, 0, 24], sizes = [2, 16, 8], strides = [1, 1, 1]} : vector<2x16x32xf32> to vector<2x16x8xf32>
    %88 = vector.extract_strided_slice %22 {offsets = [0, 0, 24], sizes = [2, 16, 8], strides = [1, 1, 1]} : vector<2x16x32xf32> to vector<2x16x8xf32>
    "tpu.trace_start"() <{level = 10 : i32, message = "bqd,bkd->bqk"}> : () -> ()
    %cst_43 = arith.constant dense<0.000000e+00> : vector<2x8x16xf32>
    %89 = tpu.matmul %86, %87, %cst_43 {dimension_numbers = #tpu.dot_dimension_numbers<[2], [2], [1], [1], [0, 0, 0, 1, 1, 1], [0], [0]>} : vector<2x8x8xf32>, vector<2x16x8xf32>, vector<2x8x16xf32> -> vector<2x8x16xf32>
    "tpu.trace_stop"() : () -> ()
    %cst_44 = arith.constant dense<0xFF800000> : vector<2x8xf32>
    %90 = vector.multi_reduction <maximumf>, %89, %cst_44 [2] : vector<2x8x16xf32> to vector<2x8xf32>
    %91 = vector.shape_cast %90 : vector<2x8xf32> to vector<2x8x1xf32>
    %92 = vector.broadcast %91 : vector<2x8x1xf32> to vector<2x8x16xf32>
    %93 = arith.subf %89, %92 : vector<2x8x16xf32>
    %94 = math.exp %93 : vector<2x8x16xf32>
    %cst_45 = arith.constant dense<0.000000e+00> : vector<2x8xf32>
    %95 = vector.multi_reduction <add>, %94, %cst_45 [2] : vector<2x8x16xf32> to vector<2x8xf32>
    %96 = vector.shape_cast %95 : vector<2x8xf32> to vector<2x8x1xf32>
    %97 = tpu.reciprocal %96 {approx = true} : vector<2x8x1xf32> -> vector<2x8x1xf32>
    %98 = vector.broadcast %97 : vector<2x8x1xf32> to vector<2x8x16xf32>
    %99 = arith.mulf %94, %98 : vector<2x8x16xf32>
    %100 = vector.shape_cast %99 : vector<2x8x16xf32> to vector<2x128xf32>
    %c3 = arith.constant 3 : index
    %c0_46 = arith.constant 0 : index
    %c0_47 = arith.constant 0 : index
    %101 = vector.load %arg11[%c3, %c0_46, %c0_47] : memref<4x2x128xf32, #tpu.memory_space<vmem>>, vector<1x2x128xf32>
    %102 = vector.shape_cast %101 : vector<1x2x128xf32> to vector<2x128xf32>
    %103 = vector.shape_cast %100 : vector<2x128xf32> to vector<1x2x128xf32>
    tpu.vector_store %arg11[%c3, %c0_46, %c0_47], %103 {strides = array<i32>} : memref<4x2x128xf32, #tpu.memory_space<vmem>>, vector<1x2x128xf32>,
    "tpu.trace_start"() <{level = 10 : i32, message = "bqk,bkd->bqd"}> : () -> ()
    %cst_48 = arith.constant dense<0.000000e+00> : vector<2x8x8xf32>
    %104 = tpu.matmul %99, %88, %cst_48 {dimension_numbers = #tpu.dot_dimension_numbers<[2], [1], [1], [2], [0, 0, 0, 1, 1, 2], [0], [0]>} : vector<2x8x16xf32>, vector<2x16x8xf32>, vector<2x8x8xf32> -> vector<2x8x8xf32>
    "tpu.trace_stop"() : () -> ()
    %105 = vector.shape_cast %104 : vector<2x8x8xf32> to vector<16x8xf32>
    %c0_49 = arith.constant 0 : index
    %c24 = arith.constant 24 : index
    %106 = vector.load %arg10[%c0_49, %c24] : memref<16x32xf32, #tpu.memory_space<vmem>>, vector<16x8xf32>
    tpu.vector_store %arg10[%c0_49, %c24], %105 {strides = array<i32>} : memref<16x32xf32, #tpu.memory_space<vmem>>, vector<16x8xf32>,
    return
  }
  func.func @transform_0(%arg0: i32) -> (i32, i32) {
    %c0_i32 = arith.constant 0 : i32
    %c0_i32_0 = arith.constant 0 : i32
    %c0_i32_1 = arith.constant 0 : i32
    return %c0_i32, %c0_i32_0 : i32, i32
  }
  func.func @transform_1(%arg0: i32) -> (i32, i32) {
    %c0_i32 = arith.constant 0 : i32
    %c0_i32_0 = arith.constant 0 : i32
    %c0_i32_1 = arith.constant 0 : i32
    return %c0_i32, %c0_i32_0 : i32, i32
  }
  func.func @transform_2(%arg0: i32) -> (i32, i32) {
    %c0_i32 = arith.constant 0 : i32
    %c0_i32_0 = arith.constant 0 : i32
    %c0_i32_1 = arith.constant 0 : i32
    return %c0_i32, %c0_i32_0 : i32, i32
  }
  func.func @transform_3(%arg0: i32) -> (i32, i32) {
    %c0_i32 = arith.constant 0 : i32
    %c0_i32_0 = arith.constant 0 : i32
    %c0_i32_1 = arith.constant 0 : i32
    return %c0_i32, %c0_i32_0 : i32, i32
  }
  func.func @transform_4(%arg0: i32) -> (i32, i32) {
    %c0_i32 = arith.constant 0 : i32
    %c0_i32_0 = arith.constant 0 : i32
    %c0_i32_1 = arith.constant 0 : i32
    return %c0_i32, %c0_i32_0 : i32, i32
  }
  func.func @transform_5(%arg0: i32) -> (i32, i32) {
    %c0_i32 = arith.constant 0 : i32
    %c0_i32_0 = arith.constant 0 : i32
    %c0_i32_1 = arith.constant 0 : i32
    return %c0_i32, %c0_i32_0 : i32, i32
  }
  func.func @transform_6(%arg0: i32) -> (i32, i32) {
    %c0_i32 = arith.constant 0 : i32
    %c0_i32_0 = arith.constant 0 : i32
    %c0_i32_1 = arith.constant 0 : i32
    return %c0_i32, %c0_i32_0 : i32, i32
  }
  func.func @transform_7(%arg0: i32) -> (i32, i32) {
    %c0_i32 = arith.constant 0 : i32
    %c0_i32_0 = arith.constant 0 : i32
    %c0_i32_1 = arith.constant 0 : i32
    return %c0_i32, %c0_i32_0 : i32, i32
  }
  func.func @transform_8(%arg0: i32) -> (i32, i32) {
    %c0_i32 = arith.constant 0 : i32
    %c0_i32_0 = arith.constant 0 : i32
    %c0_i32_1 = arith.constant 0 : i32
    return %c0_i32, %c0_i32_0 : i32, i32
  }
  func.func @transform_9(%arg0: i32) -> (i32, i32) {
    %c0_i32 = arith.constant 0 : i32
    %c0_i32_0 = arith.constant 0 : i32
    %c0_i32_1 = arith.constant 0 : i32
    return %c0_i32, %c0_i32_0 : i32, i32
  }
  func.func @transform_10(%arg0: i32) -> (i32, i32, i32) {
    %c0_i32 = arith.constant 0 : i32
    %c0_i32_0 = arith.constant 0 : i32
    %c0_i32_1 = arith.constant 0 : i32
    %c0_i32_2 = arith.constant 0 : i32
    return %c0_i32, %c0_i32_0, %c0_i32_1 : i32, i32, i32
  }
}

</mosaic_0001>

<llo_original>
// kernel: tpu_custom_call.1
$region0: #{tpu_custom_call.1}
  #allocation0 [shape = 'u32[]', space=smem, size = 0x4, offset = 0x4, fixed_abs, tag = 'smem constant byte address 0x4 - core index']
  #allocation1 [shape = 'u32[72,128]{1,0:T(1,128)}', space=vmem, size = 0x9000, scoped, tag = 'internal scratch']
  %s0 = inlined_call_operand.hbm [shape: f32[16,32], index: 0, kind: input, shape index: {}]
  %s1 = inlined_call_operand.hbm [shape: f32[32,32], index: 1, kind: input, shape index: {}]
  %s2 = inlined_call_operand.hbm [shape: f32[32,32], index: 2, kind: input, shape index: {}]
  %s3 = inlined_call_operand.hbm [shape: f32[32,32], index: 3, kind: input, shape index: {}]
  %s4 = inlined_call_operand.hbm [shape: f32[32,32], index: 4, kind: input, shape index: {}]
  %s5 = inlined_call_operand.hbm [shape: f32[32,32], index: 5, kind: input, shape index: {}]
  %s6 = inlined_call_operand.vmem [shape: f32[1,32], index: 6, kind: input, shape index: {}]
  %s7 = inlined_call_operand.vmem [shape: f32[1,32], index: 7, kind: input, shape index: {}]
  %s8 = inlined_call_operand.vmem [shape: f32[1,32], index: 8, kind: input, shape index: {}]
  %s9 = inlined_call_operand.hbm [shape: f32[16,32], index: 9, kind: output, shape index: {0}]
  %s10 = inlined_call_operand.hbm [shape: f32[4,2,128], index: 10, kind: output, shape index: {1}]
  %11 = xla_tuple %s9, %s10
  %s12 = sld [smem:[#allocation0]]
  $region78: #{tpu_custom_call.1} parent=0
    _
  %s14 = ssub.s32 1, %s12
  %s15 = scalar_select 0, %s14, %s12
  $region1: #{tpu_custom_call.1} parent=0
    #allocation2 [shape = 'u8[8192]{0}', space=vmem, size = 0x2000, scoped, tag = 'input window, operand 0, single buffered']
    #allocation3 [shape = 's32[1]{0}', space=sflag, size = 0x4, scoped, tag = 'scoped memory for tpu_custom_call.1']
    #allocation4 [shape = 's32[1]{0}', space=sflag, size = 0x4, scoped, tag = 'scoped memory for tpu_custom_call.1']
    #allocation5 [shape = 'u8[16384]{0}', space=vmem, size = 0x4000, scoped, tag = 'input window, operand 1, single buffered']
    #allocation6 [shape = 's32[1]{0}', space=sflag, size = 0x4, scoped, tag = 'scoped memory for tpu_custom_call.1']
    #allocation7 [shape = 'u8[16384]{0}', space=vmem, size = 0x4000, scoped, tag = 'input window, operand 2, single buffered']
    #allocation8 [shape = 'u8[16384]{0}', space=vmem, size = 0x4000, scoped, tag = 'input window, operand 3, single buffered']
    #allocation9 [shape = 's32[1]{0}', space=sflag, size = 0x4, scoped, tag = 'scoped memory for tpu_custom_call.1']
    #allocation10 [shape = 'u8[16384]{0}', space=vmem, size = 0x4000, scoped, tag = 'input window, operand 4, single buffered']
    #allocation11 [shape = 'u8[16384]{0}', space=vmem, size = 0x4000, scoped, tag = 'input window, operand 5, single buffered']
    #allocation12 [shape = 's32[1]{0}', space=sflag, size = 0x4, scoped, tag = 'scoped memory for tpu_custom_call.1']
    #allocation13 [shape = 'u8[8192]{0}', space=vmem, size = 0x2000, scoped, tag = 'output window, operand 0, single buffered']
    #allocation14 [shape = 'u8[4096]{0}', space=vmem, size = 0x1000, scoped, tag = 'output window, operand 1, single buffered']
    #allocation15 [shape = 's32[1]{0}', space=sflag, size = 0x4, scoped, tag = 'scoped memory for tpu_custom_call.1']
    %16 = vsyncpa [#allocation3], 0
    %17 = vsyncpa [#allocation6], 0
    %18 = vsyncpa [#allocation9], 0
    %19 = vsyncpa [#allocation12], 0
    %20 = vsyncpa [#allocation4], 0
    %21 = vsyncpa [#allocation15], 0
    // Predicated region
    $region2: #{tpu_custom_call.1} parent=1 // pred_check
      _
    $region3: #{tpu_custom_call.1} parent=1 // pred_check_branch
      %23 = sbr.rel (0) target = $region5
    $region4: #{tpu_custom_call.1} parent=1 // pred_region
      %25 = vsyncadd [#allocation3], 0
      %s26 = sshll.u32 %s0, 4
      %s27 = int_to_ptr.hbm [resolvable:$true] %s26
      %s28 = sshll.u32 [#allocation2], 4
      %s29 = int_to_ptr.vmem [resolvable:$true] %s28
      %34 = dma.hbm_to_vmem [thread:$0]  %s27, 256, %s29, [#allocation3], 128, 128, 8
    $region5: #{tpu_custom_call.1} parent=1 // pred_fallthru
      _
    // Predicated region
    $region6: #{tpu_custom_call.1} parent=1 // pred_check
      _
    $region7: #{tpu_custom_call.1} parent=1 // pred_check_branch
      %36 = sbr.rel (0) target = $region9
    $region8: #{tpu_custom_call.1} parent=1 // pred_region
      %38 = vsyncadd [#allocation6], 0
      %s39 = sshll.u32 %s1, 4
      %s40 = int_to_ptr.hbm [resolvable:$true] %s39
      %s41 = sshll.u32 [#allocation5], 4
      %s42 = int_to_ptr.vmem [resolvable:$true] %s41
      %47 = dma.hbm_to_vmem [thread:$0]  %s40, 512, %s42, [#allocation6], 128, 128, 8
    $region9: #{tpu_custom_call.1} parent=1 // pred_fallthru
      _
    // Predicated region
    $region10: #{tpu_custom_call.1} parent=1 // pred_check
      _
    $region11: #{tpu_custom_call.1} parent=1 // pred_check_branch
      %49 = sbr.rel (0) target = $region13
    $region12: #{tpu_custom_call.1} parent=1 // pred_region
      %51 = vsyncadd [#allocation6], 0
      %s52 = sshll.u32 %s2, 4
      %s53 = int_to_ptr.hbm [resolvable:$true] %s52
      %s54 = sshll.u32 [#allocation7], 4
      %s55 = int_to_ptr.vmem [resolvable:$true] %s54
      %60 = dma.hbm_to_vmem [thread:$0]  %s53, 512, %s55, [#allocation6], 128, 128, 8
    $region13: #{tpu_custom_call.1} parent=1 // pred_fallthru
      _
    // Predicated region
    $region14: #{tpu_custom_call.1} parent=1 // pred_check
      _
    $region15: #{tpu_custom_call.1} parent=1 // pred_check_branch
      %62 = sbr.rel (0) target = $region17
    $region16: #{tpu_custom_call.1} parent=1 // pred_region
      %64 = vsyncadd [#allocation9], 0
      %s65 = sshll.u32 %s3, 4
      %s66 = int_to_ptr.hbm [resolvable:$true] %s65
      %s67 = sshll.u32 [#allocation8], 4
      %s68 = int_to_ptr.vmem [resolvable:$true] %s67
      %73 = dma.hbm_to_vmem [thread:$0]  %s66, 512, %s68, [#allocation9], 128, 128, 8
    $region17: #{tpu_custom_call.1} parent=1 // pred_fallthru
      _
    // Predicated region
    $region18: #{tpu_custom_call.1} parent=1 // pred_check
      _
    $region19: #{tpu_custom_call.1} parent=1 // pred_check_branch
      %75 = sbr.rel (0) target = $region21
    $region20: #{tpu_custom_call.1} parent=1 // pred_region
      %77 = vsyncadd [#allocation9], 0
      %s78 = sshll.u32 %s4, 4
      %s79 = int_to_ptr.hbm [resolvable:$true] %s78
      %s80 = sshll.u32 [#allocation10], 4
      %s81 = int_to_ptr.vmem [resolvable:$true] %s80
      %86 = dma.hbm_to_vmem [thread:$0]  %s79, 512, %s81, [#allocation9], 128, 128, 8
    $region21: #{tpu_custom_call.1} parent=1 // pred_fallthru
      _
    // Predicated region
    $region22: #{tpu_custom_call.1} parent=1 // pred_check
      _
    $region23: #{tpu_custom_call.1} parent=1 // pred_check_branch
      %88 = sbr.rel (0) target = $region25
    $region24: #{tpu_custom_call.1} parent=1 // pred_region
      %90 = vsyncadd [#allocation12], 0
      %s91 = sshll.u32 %s5, 4
      %s92 = int_to_ptr.hbm [resolvable:$true] %s91
      %s93 = sshll.u32 [#allocation11], 4
      %s94 = int_to_ptr.vmem [resolvable:$true] %s93
      %99 = dma.hbm_to_vmem [thread:$0]  %s92, 512, %s94, [#allocation12], 128, 128, 8
    $region25: #{tpu_custom_call.1} parent=1 // pred_fallthru
      _
    // Predicated region
    $region26: #{tpu_custom_call.1} parent=1 // pred_check
      _
    $region27: #{tpu_custom_call.1} parent=1 // pred_check_branch
      %101 = sbr.rel (0) target = $region29
    $region28: #{tpu_custom_call.1} parent=1 // pred_region
      _
    $region29: #{tpu_custom_call.1} parent=1 // pred_fallthru
      _
    // Predicated region
    $region30: #{tpu_custom_call.1} parent=1 // pred_check
      _
    $region31: #{tpu_custom_call.1} parent=1 // pred_check_branch
      %103 = sbr.rel (0) target = $region33
    $region32: #{tpu_custom_call.1} parent=1 // pred_region
      _
    $region33: #{tpu_custom_call.1} parent=1 // pred_fallthru
      _
    // Predicated region
    $region34: #{tpu_custom_call.1} parent=1 // pred_check
      _
    $region35: #{tpu_custom_call.1} parent=1 // pred_check_branch
      %105 = sbr.rel (0) target = $region37
    $region36: #{tpu_custom_call.1} parent=1 // pred_region
      _
    $region37: #{tpu_custom_call.1} parent=1 // pred_fallthru
      _
    // Predicated region
    $region38: #{tpu_custom_call.1} parent=1 // pred_check
      _
    $region39: #{tpu_custom_call.1} parent=1 // pred_check_branch
      %107 = sbr.rel (0) target = $region41
    $region40: #{tpu_custom_call.1} parent=1 // pred_region
      %109 = dma.done [#allocation3], 256
    $region41: #{tpu_custom_call.1} parent=1 // pred_fallthru
      _
    // Predicated region
    $region42: #{tpu_custom_call.1} parent=1 // pred_check
      _
    $region43: #{tpu_custom_call.1} parent=1 // pred_check_branch
      %111 = sbr.rel (0) target = $region45
    $region44: #{tpu_custom_call.1} parent=1 // pred_region
      %113 = dma.done [#allocation6], 512
    $region45: #{tpu_custom_call.1} parent=1 // pred_fallthru
      _
    // Predicated region
    $region46: #{tpu_custom_call.1} parent=1 // pred_check
      _
    $region47: #{tpu_custom_call.1} parent=1 // pred_check_branch
      %115 = sbr.rel (0) target = $region49
    $region48: #{tpu_custom_call.1} parent=1 // pred_region
      %117 = dma.done [#allocation6], 512
    $region49: #{tpu_custom_call.1} parent=1 // pred_fallthru
      _
    // Predicated region
    $region50: #{tpu_custom_call.1} parent=1 // pred_check
      _
    $region51: #{tpu_custom_call.1} parent=1 // pred_check_branch
      %119 = sbr.rel (0) target = $region53
    $region52: #{tpu_custom_call.1} parent=1 // pred_region
      %121 = dma.done [#allocation9], 512
    $region53: #{tpu_custom_call.1} parent=1 // pred_fallthru
      _
    // Predicated region
    $region54: #{tpu_custom_call.1} parent=1 // pred_check
      _
    $region55: #{tpu_custom_call.1} parent=1 // pred_check_branch
      %123 = sbr.rel (0) target = $region57
    $region56: #{tpu_custom_call.1} parent=1 // pred_region
      %125 = dma.done [#allocation9], 512
    $region57: #{tpu_custom_call.1} parent=1 // pred_fallthru
      _
    // Predicated region
    $region58: #{tpu_custom_call.1} parent=1 // pred_check
      _
    $region59: #{tpu_custom_call.1} parent=1 // pred_check_branch
      %127 = sbr.rel (0) target = $region61
    $region60: #{tpu_custom_call.1} parent=1 // pred_region
      %129 = dma.done [#allocation12], 512
    $region61: #{tpu_custom_call.1} parent=1 // pred_fallthru
      _
    %v130 = vld [vmem:[#allocation2] sm:$0xff]
    %v131 = vld [vmem:[#allocation2 + $0x8] sm:$0xff]
    %v132 = vld [vmem:[#allocation8] sm:$0xff]
    %v133 = vld [vmem:[#allocation8 + $0x8] sm:$0xff]
    %v134 = vld [vmem:[#allocation8 + $0x10] sm:$0xff]
    %v135 = vld [vmem:[#allocation8 + $0x18] sm:$0xff]
    %v136 = vld [vmem:[%s6] sm:$0x1]
    %v138 = vperm.slane %v136, 0
    %vm140 = vcmask 261120
    %v142 = vsel %vm140, %v130, 0
    %v145 = vsel %vm140, %v131, 0
    %147 = vmatpush.msra.mxu0 0.0
    %148 = vmatpush.msra.mxu0 0.0
    %149 = vmatpush.msra.mxu0 0.0
    %150 = vmatpush.msra.mxu0 0.0
    %151 = vmatpush.msra.mxu0 0.0
    %152 = vmatpush.msra.mxu0 0.0
    %153 = vmatpush.msra.mxu0 0.0
    %154 = vmatpush.msra.mxu0 0.0
    %155 = vmatpush.msra.mxu0 0.0
    %156 = vmatpush.msra.mxu0 0.0
    %157 = vmatpush.msra.mxu0 0.0
    %158 = vmatpush.msra.mxu0 0.0
    %159 = vmatpush.msra.mxu0 %v135
    %160 = vmatpush.msra.mxu0 %v134
    %161 = vmatpush.msra.mxu0 %v133
    %162 = vmatpush.msra.mxu0 %v132
    %163 = vmatmul.f32.gmra.mxu0 %v142
    %v164 = vpop.f32.mrf.mxu0
    %v165 = vadd.f32 %v138, %v164
    %166 = vmatmul.f32.gmra.mxu0 %v145
    %v167 = vpop.f32.mrf.mxu0
    %v168 = vadd.f32 %v138, %v167
    %169 = vdwg.mxu0
    %v170 = vld [vmem:[#allocation5] sm:$0xff]
    %v171 = vld [vmem:[#allocation5 + $0x8] sm:$0xff]
    %v172 = vld [vmem:[#allocation5 + $0x10] sm:$0xff]
    %v173 = vld [vmem:[#allocation5 + $0x18] sm:$0xff]
    %v174 = vld [vmem:[#allocation10] sm:$0xff]
    %v175 = vld [vmem:[#allocation10 + $0x8] sm:$0xff]
    %v176 = vld [vmem:[#allocation10 + $0x10] sm:$0xff]
    %v177 = vld [vmem:[#allocation10 + $0x18] sm:$0xff]
    %v178 = vld [vmem:[%s7] sm:$0x1]
    %v180 = vperm.slane %v178, 0
    %v183 = vsel %vm140, %v170, 0
    %v186 = vsel %vm140, %v171, 0
    %v189 = vsel %vm140, %v172, 0
    %v192 = vsel %vm140, %v173, 0
    %194 = vmatpush.msra.mxu0 0.0
    %195 = vmatpush.msra.mxu0 0.0
    %196 = vmatpush.msra.mxu0 0.0
    %197 = vmatpush.msra.mxu0 0.0
    %198 = vmatpush.msra.mxu0 0.0
    %199 = vmatpush.msra.mxu0 0.0
    %200 = vmatpush.msra.mxu0 0.0
    %201 = vmatpush.msra.mxu0 0.0
    %202 = vmatpush.msra.mxu0 0.0
    %203 = vmatpush.msra.mxu0 0.0
    %204 = vmatpush.msra.mxu0 0.0
    %205 = vmatpush.msra.mxu0 0.0
    %206 = vmatpush.msra.mxu0 %v177
    %207 = vmatpush.msra.mxu0 %v176
    %208 = vmatpush.msra.mxu0 %v175
    %209 = vmatpush.msra.mxu0 %v174
    %210 = vmatmul.f32.gmra.mxu0 %v183
    %v211 = vpop.f32.mrf.mxu0
    %v212 = vadd.f32 %v180, %v211
    %213 = vmatmul.f32.gmra.mxu0 %v186
    %v214 = vpop.f32.mrf.mxu0
    %v215 = vadd.f32 %v180, %v214
    %216 = vmatmul.f32.gmra.mxu0 %v189
    %v217 = vpop.f32.mrf.mxu0
    %v218 = vadd.f32 %v180, %v217
    %219 = vmatmul.f32.gmra.mxu0 %v192
    %v220 = vpop.f32.mrf.mxu0
    %v221 = vadd.f32 %v180, %v220
    %222 = vdwg.mxu0
    %v223 = vld [vmem:[#allocation7] sm:$0xff]
    %v224 = vld [vmem:[#allocation7 + $0x8] sm:$0xff]
    %v225 = vld [vmem:[#allocation7 + $0x10] sm:$0xff]
    %v226 = vld [vmem:[#allocation7 + $0x18] sm:$0xff]
    %v227 = vld [vmem:[#allocation11] sm:$0xff]
    %v228 = vld [vmem:[#allocation11 + $0x8] sm:$0xff]
    %v229 = vld [vmem:[#allocation11 + $0x10] sm:$0xff]
    %v230 = vld [vmem:[#allocation11 + $0x18] sm:$0xff]
    %v231 = vld [vmem:[%s8] sm:$0x1]
    %v233 = vperm.slane %v231, 0
    %v236 = vsel %vm140, %v223, 0
    %v239 = vsel %vm140, %v224, 0
    %v242 = vsel %vm140, %v225, 0
    %v245 = vsel %vm140, %v226, 0
    %247 = vmatpush.msra.mxu0 0.0
    %248 = vmatpush.msra.mxu0 0.0
    %249 = vmatpush.msra.mxu0 0.0
    %250 = vmatpush.msra.mxu0 0.0
    %251 = vmatpush.msra.mxu0 0.0
    %252 = vmatpush.msra.mxu0 0.0
    %253 = vmatpush.msra.mxu0 0.0
    %254 = vmatpush.msra.mxu0 0.0
    %255 = vmatpush.msra.mxu0 0.0
    %256 = vmatpush.msra.mxu0 0.0
    %257 = vmatpush.msra.mxu0 0.0
    %258 = vmatpush.msra.mxu0 0.0
    %259 = vmatpush.msra.mxu0 %v230
    %260 = vmatpush.msra.mxu0 %v229
    %261 = vmatpush.msra.mxu0 %v228
    %262 = vmatpush.msra.mxu0 %v227
    %263 = vmatmul.f32.gmra.mxu0 %v236
    %v264 = vpop.f32.mrf.mxu0
    %v265 = vadd.f32 %v233, %v264
    %266 = vmatmul.f32.gmra.mxu0 %v239
    %v267 = vpop.f32.mrf.mxu0
    %v268 = vadd.f32 %v233, %v267
    %269 = vmatmul.f32.gmra.mxu0 %v242
    %v270 = vpop.f32.mrf.mxu0
    %v271 = vadd.f32 %v233, %v270
    %272 = vmatmul.f32.gmra.mxu0 %v245
    %v273 = vpop.f32.mrf.mxu0
    %v274 = vadd.f32 %v233, %v273
    %275 = vdwg.mxu0
    %v276 = vmul.f32 %v165, 0.17677669
    %v277 = vmul.f32 %v168, 0.17677669
    %vm278 = vcmask 64512
    %v280 = vsel %vm278, %v276, 0
    %v283 = vsel %vm278, %v212, 0
    %v286 = vsel %vm278, %v215, 0
    %288 = vmatpush.xpose.msra.mxu0 0.0
    %289 = vmatpush.xpose.msra.mxu0 0.0
    %290 = vmatpush.xpose.msra.mxu0 0.0
    %291 = vmatpush.xpose.msra.mxu0 0.0
    %292 = vmatpush.xpose.msra.mxu0 0.0
    %293 = vmatpush.xpose.msra.mxu0 0.0
    %294 = vmatpush.xpose.msra.mxu0 0.0
    %295 = vmatpush.xpose.msra.mxu0 0.0
    %296 = vmatpush.xpose.msra.mxu0 0.0
    %297 = vmatpush.xpose.msra.mxu0 0.0
    %298 = vmatpush.xpose.msra.mxu0 0.0
    %299 = vmatpush.xpose.msra.mxu0 0.0
    %300 = vmatpush.xpose.msra.mxu0 0.0
    %301 = vmatpush.xpose.msra.mxu0 0.0
    %302 = vmatpush.xpose.msra.mxu0 %v286
    %303 = vmatpush.xpose.msra.mxu0 %v283
    %304 = vmatmul.f32.gmra.mxu0 %v280
    %v305 = vpop.f32.mrf.mxu0
    %v306 = vadd.f32 0.0, %v305
    %307 = vdwg.mxu0
    %v309 = vsel %vm278, %v277, 0
    %v312 = vsel %vm278, %v218, 0
    %v315 = vsel %vm278, %v221, 0
    %317 = vmatpush.xpose.msra.mxu0 0.0
    %318 = vmatpush.xpose.msra.mxu0 0.0
    %319 = vmatpush.xpose.msra.mxu0 0.0
    %320 = vmatpush.xpose.msra.mxu0 0.0
    %321 = vmatpush.xpose.msra.mxu0 0.0
    %322 = vmatpush.xpose.msra.mxu0 0.0
    %323 = vmatpush.xpose.msra.mxu0 0.0
    %324 = vmatpush.xpose.msra.mxu0 0.0
    %325 = vmatpush.xpose.msra.mxu0 0.0
    %326 = vmatpush.xpose.msra.mxu0 0.0
    %327 = vmatpush.xpose.msra.mxu0 0.0
    %328 = vmatpush.xpose.msra.mxu0 0.0
    %329 = vmatpush.xpose.msra.mxu0 0.0
    %330 = vmatpush.xpose.msra.mxu0 0.0
    %331 = vmatpush.xpose.msra.mxu0 %v315
    %332 = vmatpush.xpose.msra.mxu0 %v312
    %333 = vmatmul.f32.gmra.mxu0 %v309
    %v334 = vpop.f32.mrf.mxu0
    %v335 = vadd.f32 0.0, %v334
    %336 = vdwg.mxu0
    %vm337 = vcmask 130048
    %v338 = vsel %vm337, %v306, -inf
    %339 = vmax.xlane.f32.xlu0 %v338
    %v340 = vpop.xlane.xlu0 %339
    %v341 = vsel %vm337, %v335, -inf
    %342 = vmax.xlane.f32.xlu0 %v341
    %v343 = vpop.xlane.xlu0 %342
    %v344 = vsub.f32 %v306, %v340
    %v345 = vsub.f32 %v335, %v343
    %v346 = vmul.f32 %v344, 1.442695
    %v347 = vpow.pop %v346
    %v348 = vmul.f32 %v345, 1.442695
    %v349 = vpow.pop %v348
    %v350 = vsel %vm337, %v347, 0.0
    %351 = vadd.xlane.f32.xlu0 %v350
    %v352 = vpop.xlane.xlu0 %351
    %v353 = vsel %vm337, %v349, 0.0
    %354 = vadd.xlane.f32.xlu0 %v353
    %v355 = vpop.xlane.xlu0 %354
    %v356 = vrcp.pop %v352
    %v357 = vrcp.pop %v355
    %v358 = vmul.f32 %v347, %v356
    %v359 = vmul.f32 %v349, %v357
    %v360 = vrot.slane %v358, 4
    %vm361 = vcmask 1047556
    %v362 = vsel %vm361, 0.0, %v360
    %v364 = vunpack.c.l.s4 1983009808
    %v365 = vunpack.c.0.s8 %v364
    %v366 = vperm.slane %v358, %v365
    %v368 = vunpack.c.l.s4 1983009808
    %v369 = vunpack.c.0.s8 %v368
    %v370 = vperm.slane %v362, %v369
    %v371 = vrot.slane %v359, 4
    %v372 = vsel %vm361, 0.0, %v371
    %v374 = vunpack.c.l.s4 1983009808
    %v375 = vunpack.c.0.s8 %v374
    %v376 = vperm.slane %v359, %v375
    %v378 = vunpack.c.l.s4 1983009808
    %v379 = vunpack.c.0.s8 %v378
    %v380 = vperm.slane %v372, %v379
    %v381 = vrot.slane %v376, 4
    %v382 = vsel %vm361, %v381, %v366
    %v383 = vrot.slane %v366, 4
    %v384 = vsel %vm361, %v376, %v383
    %v386 = vunpack.c.l.s4 1934713408
    %v387 = vunpack.c.0.s8 %v386
    %v388 = vperm.slane %v382, %v387
    %v390 = vunpack.c.l.s4 1934713408
    %v391 = vunpack.c.0.s8 %v390
    %v392 = vperm.slane %v384, %v391
    %v393 = vrot.slane %v380, 4
    %v394 = vsel %vm361, %v393, %v370
    %v395 = vrot.slane %v370, 4
    %v396 = vsel %vm361, %v380, %v395
    %v398 = vunpack.c.l.s4 1934713408
    %v399 = vunpack.c.0.s8 %v398
    %v400 = vperm.slane %v394, %v399
    %v402 = vunpack.c.l.s4 1934713408
    %v403 = vunpack.c.0.s8 %v402
    %v404 = vperm.slane %v396, %v403
    %v405 = vrot.slane %v388, 4
    %v406 = vsel %vm361, 0.0, %v405
    %v407 = vrot.slane %v392, 4
    %v408 = vsel %vm361, 0.0, %v407
    %v409 = vrot.slane %v400, 4
    %v410 = vsel %vm361, 0.0, %v409
    %v411 = vrot.slane %v404, 4
    %v412 = vsel %vm361, 0.0, %v411
    %414 = vrot.lane.b32.xlu0 %v406, 16
    %v415 = vpop.permute.xlu0 %414
    %418 = vrot.lane.b32.xlu0 %v392, 32
    %v419 = vpop.permute.xlu0 %418
    %422 = vrot.lane.b32.xlu0 %v408, 48
    %v423 = vpop.permute.xlu0 %422
    %426 = vrot.lane.b32.xlu0 %v400, 64
    %v427 = vpop.permute.xlu0 %426
    %430 = vrot.lane.b32.xlu0 %v410, 80
    %v431 = vpop.permute.xlu0 %430
    %434 = vrot.lane.b32.xlu0 %v404, 96
    %v435 = vpop.permute.xlu0 %434
    %438 = vrot.lane.b32.xlu0 %v412, 112
    %v439 = vpop.permute.xlu0 %438
    %v441 = vsel %vm337, %v388, %v415
    %v442 = vsel %vm140, %v441, %v419
    %vm443 = vcmask 392192
    %v444 = vsel %vm443, %v442, %v423
    %vm445 = vcmask 523264
    %v446 = vsel %vm445, %v444, %v427
    %vm447 = vcmask 654336
    %v448 = vsel %vm447, %v446, %v431
    %vm449 = vcmask 785408
    %v450 = vsel %vm449, %v448, %v435
    %vm451 = vcmask 916480
    %v452 = vsel %vm451, %v450, %v439
    %453 = vst [vmem:[#allocation14] sm:$0x3] %v452
    %v455 = vsel %vm337, %v358, 0
    %457 = vmatpush.msra.mxu0 0.0
    %458 = vmatpush.msra.mxu0 0.0
    %459 = vmatpush.msra.mxu0 0.0
    %460 = vmatpush.msra.mxu0 0.0
    %461 = vmatpush.msra.mxu0 0.0
    %462 = vmatpush.msra.mxu0 0.0
    %463 = vmatpush.msra.mxu0 0.0
    %464 = vmatpush.msra.mxu0 0.0
    %465 = vmatpush.msra.mxu0 0.0
    %466 = vmatpush.msra.mxu0 0.0
    %467 = vmatpush.msra.mxu0 0.0
    %468 = vmatpush.msra.mxu0 0.0
    %469 = vmatpush.msra.mxu0 0.0
    %470 = vmatpush.msra.mxu0 0.0
    %471 = vmatpush.msra.mxu0 %v268
    %472 = vmatpush.msra.mxu0 %v265
    %473 = vmatmul.f32.gmra.mxu0 %v455
    %v474 = vpop.f32.mrf.mxu0
    %v475 = vadd.f32 0.0, %v474
    %476 = vdwg.mxu0
    %v478 = vsel %vm337, %v359, 0
    %480 = vmatpush.msra.mxu0 0.0
    %481 = vmatpush.msra.mxu0 0.0
    %482 = vmatpush.msra.mxu0 0.0
    %483 = vmatpush.msra.mxu0 0.0
    %484 = vmatpush.msra.mxu0 0.0
    %485 = vmatpush.msra.mxu0 0.0
    %486 = vmatpush.msra.mxu0 0.0
    %487 = vmatpush.msra.mxu0 0.0
    %488 = vmatpush.msra.mxu0 0.0
    %489 = vmatpush.msra.mxu0 0.0
    %490 = vmatpush.msra.mxu0 0.0
    %491 = vmatpush.msra.mxu0 0.0
    %492 = vmatpush.msra.mxu0 0.0
    %493 = vmatpush.msra.mxu0 0.0
    %494 = vmatpush.msra.mxu0 %v274
    %495 = vmatpush.msra.mxu0 %v271
    %496 = vmatmul.f32.gmra.mxu0 %v478
    %v497 = vpop.f32.mrf.mxu0
    %v498 = vadd.f32 0.0, %v497
    %499 = vdwg.mxu0
    %500 = vst.msk [vmem:[#allocation13] sm:$0xff] %vm278, %v475
    %501 = vst.msk [vmem:[#allocation13 + $0x8] sm:$0xff] %vm278, %v498
    %502 = vrot.lane.b32.xlu0 %v276, 120
    %v503 = vpop.permute.xlu0 %502
    %504 = vrot.lane.b32.xlu0 %v212, 120
    %v505 = vpop.permute.xlu0 %504
    %506 = vrot.lane.b32.xlu0 %v215, 120
    %v507 = vpop.permute.xlu0 %506
    %v508 = vsel %vm278, %v503, 0
    %v510 = vsel %vm278, %v505, 0
    %v512 = vsel %vm278, %v507, 0
    %514 = vmatpush.xpose.msra.mxu0 0.0
    %515 = vmatpush.xpose.msra.mxu0 0.0
    %516 = vmatpush.xpose.msra.mxu0 0.0
    %517 = vmatpush.xpose.msra.mxu0 0.0
    %518 = vmatpush.xpose.msra.mxu0 0.0
    %519 = vmatpush.xpose.msra.mxu0 0.0
    %520 = vmatpush.xpose.msra.mxu0 0.0
    %521 = vmatpush.xpose.msra.mxu0 0.0
    %522 = vmatpush.xpose.msra.mxu0 0.0
    %523 = vmatpush.xpose.msra.mxu0 0.0
    %524 = vmatpush.xpose.msra.mxu0 0.0
    %525 = vmatpush.xpose.msra.mxu0 0.0
    %526 = vmatpush.xpose.msra.mxu0 0.0
    %527 = vmatpush.xpose.msra.mxu0 0.0
    %528 = vmatpush.xpose.msra.mxu0 %v512
    %529 = vmatpush.xpose.msra.mxu0 %v510
    %530 = vmatmul.f32.gmra.mxu0 %v508
    %v531 = vpop.f32.mrf.mxu0
    %v532 = vadd.f32 0.0, %v531
    %533 = vdwg.mxu0
    %534 = vrot.lane.b32.xlu0 %v277, 120
    %v535 = vpop.permute.xlu0 %534
    %536 = vrot.lane.b32.xlu0 %v218, 120
    %v537 = vpop.permute.xlu0 %536
    %538 = vrot.lane.b32.xlu0 %v221, 120
    %v539 = vpop.permute.xlu0 %538
    %v540 = vsel %vm278, %v535, 0
    %v542 = vsel %vm278, %v537, 0
    %v544 = vsel %vm278, %v539, 0
    %546 = vmatpush.xpose.msra.mxu0 0.0
    %547 = vmatpush.xpose.msra.mxu0 0.0
    %548 = vmatpush.xpose.msra.mxu0 0.0
    %549 = vmatpush.xpose.msra.mxu0 0.0
    %550 = vmatpush.xpose.msra.mxu0 0.0
    %551 = vmatpush.xpose.msra.mxu0 0.0
    %552 = vmatpush.xpose.msra.mxu0 0.0
    %553 = vmatpush.xpose.msra.mxu0 0.0
    %554 = vmatpush.xpose.msra.mxu0 0.0
    %555 = vmatpush.xpose.msra.mxu0 0.0
    %556 = vmatpush.xpose.msra.mxu0 0.0
    %557 = vmatpush.xpose.msra.mxu0 0.0
    %558 = vmatpush.xpose.msra.mxu0 0.0
    %559 = vmatpush.xpose.msra.mxu0 0.0
    %560 = vmatpush.xpose.msra.mxu0 %v544
    %561 = vmatpush.xpose.msra.mxu0 %v542
    %562 = vmatmul.f32.gmra.mxu0 %v540
    %v563 = vpop.f32.mrf.mxu0
    %v564 = vadd.f32 0.0, %v563
    %565 = vdwg.mxu0
    %v566 = vsel %vm337, %v532, -inf
    %567 = vmax.xlane.f32.xlu0 %v566
    %v568 = vpop.xlane.xlu0 %567
    %v569 = vsel %vm337, %v564, -inf
    %570 = vmax.xlane.f32.xlu0 %v569
    %v571 = vpop.xlane.xlu0 %570
    %v572 = vsub.f32 %v532, %v568
    %v573 = vsub.f32 %v564, %v571
    %v574 = vmul.f32 %v572, 1.442695
    %v575 = vpow.pop %v574
    %v576 = vmul.f32 %v573, 1.442695
    %v577 = vpow.pop %v576
    %v578 = vsel %vm337, %v575, 0.0
    %579 = vadd.xlane.f32.xlu0 %v578
    %v580 = vpop.xlane.xlu0 %579
    %v581 = vsel %vm337, %v577, 0.0
    %582 = vadd.xlane.f32.xlu0 %v581
    %v583 = vpop.xlane.xlu0 %582
    %v584 = vrcp.pop %v580
    %v585 = vrcp.pop %v583
    %v586 = vmul.f32 %v575, %v584
    %v587 = vmul.f32 %v577, %v585
    %v588 = vrot.slane %v586, 4
    %v589 = vsel %vm361, 0.0, %v588
    %v591 = vunpack.c.l.s4 1983009808
    %v592 = vunpack.c.0.s8 %v591
    %v593 = vperm.slane %v586, %v592
    %v595 = vunpack.c.l.s4 1983009808
    %v596 = vunpack.c.0.s8 %v595
    %v597 = vperm.slane %v589, %v596
    %v598 = vrot.slane %v587, 4
    %v599 = vsel %vm361, 0.0, %v598
    %v601 = vunpack.c.l.s4 1983009808
    %v602 = vunpack.c.0.s8 %v601
    %v603 = vperm.slane %v587, %v602
    %v605 = vunpack.c.l.s4 1983009808
    %v606 = vunpack.c.0.s8 %v605
    %v607 = vperm.slane %v599, %v606
    %v608 = vrot.slane %v603, 4
    %v609 = vsel %vm361, %v608, %v593
    %v610 = vrot.slane %v593, 4
    %v611 = vsel %vm361, %v603, %v610
    %v613 = vunpack.c.l.s4 1934713408
    %v614 = vunpack.c.0.s8 %v613
    %v615 = vperm.slane %v609, %v614
    %v617 = vunpack.c.l.s4 1934713408
    %v618 = vunpack.c.0.s8 %v617
    %v619 = vperm.slane %v611, %v618
    %v620 = vrot.slane %v607, 4
    %v621 = vsel %vm361, %v620, %v597
    %v622 = vrot.slane %v597, 4
    %v623 = vsel %vm361, %v607, %v622
    %v625 = vunpack.c.l.s4 1934713408
    %v626 = vunpack.c.0.s8 %v625
    %v627 = vperm.slane %v621, %v626
    %v629 = vunpack.c.l.s4 1934713408
    %v630 = vunpack.c.0.s8 %v629
    %v631 = vperm.slane %v623, %v630
    %v632 = vrot.slane %v615, 4
    %v633 = vsel %vm361, 0.0, %v632
    %v634 = vrot.slane %v619, 4
    %v635 = vsel %vm361, 0.0, %v634
    %v636 = vrot.slane %v627, 4
    %v637 = vsel %vm361, 0.0, %v636
    %v638 = vrot.slane %v631, 4
    %v639 = vsel %vm361, 0.0, %v638
    %641 = vrot.lane.b32.xlu0 %v633, 16
    %v642 = vpop.permute.xlu0 %641
    %645 = vrot.lane.b32.xlu0 %v619, 32
    %v646 = vpop.permute.xlu0 %645
    %649 = vrot.lane.b32.xlu0 %v635, 48
    %v650 = vpop.permute.xlu0 %649
    %653 = vrot.lane.b32.xlu0 %v627, 64
    %v654 = vpop.permute.xlu0 %653
    %657 = vrot.lane.b32.xlu0 %v637, 80
    %v658 = vpop.permute.xlu0 %657
    %661 = vrot.lane.b32.xlu0 %v631, 96
    %v662 = vpop.permute.xlu0 %661
    %665 = vrot.lane.b32.xlu0 %v639, 112
    %v666 = vpop.permute.xlu0 %665
    %v668 = vsel %vm337, %v615, %v642
    %v669 = vsel %vm140, %v668, %v646
    %v670 = vsel %vm443, %v669, %v650
    %v671 = vsel %vm445, %v670, %v654
    %v672 = vsel %vm447, %v671, %v658
    %v673 = vsel %vm449, %v672, %v662
    %v674 = vsel %vm451, %v673, %v666
    %s675 = scalar_lea.vmem [#allocation14], 2
    %676 = vst [vmem:[%s675] sm:$0x3] %v674
    %679 = vrot.lane.b32.xlu0 %v265, 120
    %v680 = vpop.permute.xlu0 %679
    %681 = vrot.lane.b32.xlu0 %v268, 120
    %v682 = vpop.permute.xlu0 %681
    %v686 = vsel %vm337, %v586, 0
    %688 = vmatpush.msra.mxu0 0.0
    %689 = vmatpush.msra.mxu0 0.0
    %690 = vmatpush.msra.mxu0 0.0
    %691 = vmatpush.msra.mxu0 0.0
    %692 = vmatpush.msra.mxu0 0.0
    %693 = vmatpush.msra.mxu0 0.0
    %694 = vmatpush.msra.mxu0 0.0
    %695 = vmatpush.msra.mxu0 0.0
    %696 = vmatpush.msra.mxu0 0.0
    %697 = vmatpush.msra.mxu0 0.0
    %698 = vmatpush.msra.mxu0 0.0
    %699 = vmatpush.msra.mxu0 0.0
    %700 = vmatpush.msra.mxu0 0.0
    %701 = vmatpush.msra.mxu0 0.0
    %702 = vmatpush.msra.mxu0 %v682
    %703 = vmatpush.msra.mxu0 %v680
    %704 = vmatmul.f32.gmra.mxu0 %v686
    %v705 = vpop.f32.mrf.mxu0
    %v706 = vadd.f32 0.0, %v705
    %707 = vdwg.mxu0
    %710 = vrot.lane.b32.xlu0 %v271, 120
    %v711 = vpop.permute.xlu0 %710
    %712 = vrot.lane.b32.xlu0 %v274, 120
    %v713 = vpop.permute.xlu0 %712
    %v717 = vsel %vm337, %v587, 0
    %719 = vmatpush.msra.mxu0 0.0
    %720 = vmatpush.msra.mxu0 0.0
    %721 = vmatpush.msra.mxu0 0.0
    %722 = vmatpush.msra.mxu0 0.0
    %723 = vmatpush.msra.mxu0 0.0
    %724 = vmatpush.msra.mxu0 0.0
    %725 = vmatpush.msra.mxu0 0.0
    %726 = vmatpush.msra.mxu0 0.0
    %727 = vmatpush.msra.mxu0 0.0
    %728 = vmatpush.msra.mxu0 0.0
    %729 = vmatpush.msra.mxu0 0.0
    %730 = vmatpush.msra.mxu0 0.0
    %731 = vmatpush.msra.mxu0 0.0
    %732 = vmatpush.msra.mxu0 0.0
    %733 = vmatpush.msra.mxu0 %v713
    %734 = vmatpush.msra.mxu0 %v711
    %735 = vmatmul.f32.gmra.mxu0 %v717
    %v736 = vpop.f32.mrf.mxu0
    %v737 = vadd.f32 0.0, %v736
    %738 = vdwg.mxu0
    %741 = vrot.lane.b32.xlu0 %v706, 8
    %v742 = vpop.permute.xlu0 %741
    %743 = vrot.lane.b32.xlu0 %v737, 8
    %v744 = vpop.permute.xlu0 %743
    %vm747 = vcmask 130112
    %748 = vst.msk [vmem:[#allocation13] sm:$0xff] %vm747, %v742
    %749 = vst.msk [vmem:[#allocation13 + $0x8] sm:$0xff] %vm747, %v744
    %750 = vrot.lane.b32.xlu0 %v276, 112
    %v751 = vpop.permute.xlu0 %750
    %752 = vrot.lane.b32.xlu0 %v212, 112
    %v753 = vpop.permute.xlu0 %752
    %754 = vrot.lane.b32.xlu0 %v215, 112
    %v755 = vpop.permute.xlu0 %754
    %v756 = vsel %vm278, %v751, 0
    %v758 = vsel %vm278, %v753, 0
    %v760 = vsel %vm278, %v755, 0
    %762 = vmatpush.xpose.msra.mxu0 0.0
    %763 = vmatpush.xpose.msra.mxu0 0.0
    %764 = vmatpush.xpose.msra.mxu0 0.0
    %765 = vmatpush.xpose.msra.mxu0 0.0
    %766 = vmatpush.xpose.msra.mxu0 0.0
    %767 = vmatpush.xpose.msra.mxu0 0.0
    %768 = vmatpush.xpose.msra.mxu0 0.0
    %769 = vmatpush.xpose.msra.mxu0 0.0
    %770 = vmatpush.xpose.msra.mxu0 0.0
    %771 = vmatpush.xpose.msra.mxu0 0.0
    %772 = vmatpush.xpose.msra.mxu0 0.0
    %773 = vmatpush.xpose.msra.mxu0 0.0
    %774 = vmatpush.xpose.msra.mxu0 0.0
    %775 = vmatpush.xpose.msra.mxu0 0.0
    %776 = vmatpush.xpose.msra.mxu0 %v760
    %777 = vmatpush.xpose.msra.mxu0 %v758
    %778 = vmatmul.f32.gmra.mxu0 %v756
    %v779 = vpop.f32.mrf.mxu0
    %v780 = vadd.f32 0.0, %v779
    %781 = vdwg.mxu0
    %782 = vrot.lane.b32.xlu0 %v277, 112
    %v783 = vpop.permute.xlu0 %782
    %784 = vrot.lane.b32.xlu0 %v218, 112
    %v785 = vpop.permute.xlu0 %784
    %786 = vrot.lane.b32.xlu0 %v221, 112
    %v787 = vpop.permute.xlu0 %786
    %v788 = vsel %vm278, %v783, 0
    %v790 = vsel %vm278, %v785, 0
    %v792 = vsel %vm278, %v787, 0
    %794 = vmatpush.xpose.msra.mxu0 0.0
    %795 = vmatpush.xpose.msra.mxu0 0.0
    %796 = vmatpush.xpose.msra.mxu0 0.0
    %797 = vmatpush.xpose.msra.mxu0 0.0
    %798 = vmatpush.xpose.msra.mxu0 0.0
    %799 = vmatpush.xpose.msra.mxu0 0.0
    %800 = vmatpush.xpose.msra.mxu0 0.0
    %801 = vmatpush.xpose.msra.mxu0 0.0
    %802 = vmatpush.xpose.msra.mxu0 0.0
    %803 = vmatpush.xpose.msra.mxu0 0.0
    %804 = vmatpush.xpose.msra.mxu0 0.0
    %805 = vmatpush.xpose.msra.mxu0 0.0
    %806 = vmatpush.xpose.msra.mxu0 0.0
    %807 = vmatpush.xpose.msra.mxu0 0.0
    %808 = vmatpush.xpose.msra.mxu0 %v792
    %809 = vmatpush.xpose.msra.mxu0 %v790
    %810 = vmatmul.f32.gmra.mxu0 %v788
    %v811 = vpop.f32.mrf.mxu0
    %v812 = vadd.f32 0.0, %v811
    %813 = vdwg.mxu0
    %v814 = vsel %vm337, %v780, -inf
    %815 = vmax.xlane.f32.xlu0 %v814
    %v816 = vpop.xlane.xlu0 %815
    %v817 = vsel %vm337, %v812, -inf
    %818 = vmax.xlane.f32.xlu0 %v817
    %v819 = vpop.xlane.xlu0 %818
    %v820 = vsub.f32 %v780, %v816
    %v821 = vsub.f32 %v812, %v819
    %v822 = vmul.f32 %v820, 1.442695
    %v823 = vpow.pop %v822
    %v824 = vmul.f32 %v821, 1.442695
    %v825 = vpow.pop %v824
    %v826 = vsel %vm337, %v823, 0.0
    %827 = vadd.xlane.f32.xlu0 %v826
    %v828 = vpop.xlane.xlu0 %827
    %v829 = vsel %vm337, %v825, 0.0
    %830 = vadd.xlane.f32.xlu0 %v829
    %v831 = vpop.xlane.xlu0 %830
    %v832 = vrcp.pop %v828
    %v833 = vrcp.pop %v831
    %v834 = vmul.f32 %v823, %v832
    %v835 = vmul.f32 %v825, %v833
    %v836 = vrot.slane %v834, 4
    %v837 = vsel %vm361, 0.0, %v836
    %v839 = vunpack.c.l.s4 1983009808
    %v840 = vunpack.c.0.s8 %v839
    %v841 = vperm.slane %v834, %v840
    %v843 = vunpack.c.l.s4 1983009808
    %v844 = vunpack.c.0.s8 %v843
    %v845 = vperm.slane %v837, %v844
    %v846 = vrot.slane %v835, 4
    %v847 = vsel %vm361, 0.0, %v846
    %v849 = vunpack.c.l.s4 1983009808
    %v850 = vunpack.c.0.s8 %v849
    %v851 = vperm.slane %v835, %v850
    %v853 = vunpack.c.l.s4 1983009808
    %v854 = vunpack.c.0.s8 %v853
    %v855 = vperm.slane %v847, %v854
    %v856 = vrot.slane %v851, 4
    %v857 = vsel %vm361, %v856, %v841
    %v858 = vrot.slane %v841, 4
    %v859 = vsel %vm361, %v851, %v858
    %v861 = vunpack.c.l.s4 1934713408
    %v862 = vunpack.c.0.s8 %v861
    %v863 = vperm.slane %v857, %v862
    %v865 = vunpack.c.l.s4 1934713408
    %v866 = vunpack.c.0.s8 %v865
    %v867 = vperm.slane %v859, %v866
    %v868 = vrot.slane %v855, 4
    %v869 = vsel %vm361, %v868, %v845
    %v870 = vrot.slane %v845, 4
    %v871 = vsel %vm361, %v855, %v870
    %v873 = vunpack.c.l.s4 1934713408
    %v874 = vunpack.c.0.s8 %v873
    %v875 = vperm.slane %v869, %v874
    %v877 = vunpack.c.l.s4 1934713408
    %v878 = vunpack.c.0.s8 %v877
    %v879 = vperm.slane %v871, %v878
    %v880 = vrot.slane %v863, 4
    %v881 = vsel %vm361, 0.0, %v880
    %v882 = vrot.slane %v867, 4
    %v883 = vsel %vm361, 0.0, %v882
    %v884 = vrot.slane %v875, 4
    %v885 = vsel %vm361, 0.0, %v884
    %v886 = vrot.slane %v879, 4
    %v887 = vsel %vm361, 0.0, %v886
    %889 = vrot.lane.b32.xlu0 %v881, 16
    %v890 = vpop.permute.xlu0 %889
    %893 = vrot.lane.b32.xlu0 %v867, 32
    %v894 = vpop.permute.xlu0 %893
    %897 = vrot.lane.b32.xlu0 %v883, 48
    %v898 = vpop.permute.xlu0 %897
    %901 = vrot.lane.b32.xlu0 %v875, 64
    %v902 = vpop.permute.xlu0 %901
    %905 = vrot.lane.b32.xlu0 %v885, 80
    %v906 = vpop.permute.xlu0 %905
    %909 = vrot.lane.b32.xlu0 %v879, 96
    %v910 = vpop.permute.xlu0 %909
    %913 = vrot.lane.b32.xlu0 %v887, 112
    %v914 = vpop.permute.xlu0 %913
    %v916 = vsel %vm337, %v863, %v890
    %v917 = vsel %vm140, %v916, %v894
    %v918 = vsel %vm443, %v917, %v898
    %v919 = vsel %vm445, %v918, %v902
    %v920 = vsel %vm447, %v919, %v906
    %v921 = vsel %vm449, %v920, %v910
    %v922 = vsel %vm451, %v921, %v914
    %s923 = scalar_lea.vmem [#allocation14], 4
    %924 = vst [vmem:[%s923] sm:$0x3] %v922
    %925 = vrot.lane.b32.xlu0 %v265, 112
    %v926 = vpop.permute.xlu0 %925
    %927 = vrot.lane.b32.xlu0 %v268, 112
    %v928 = vpop.permute.xlu0 %927
    %v932 = vsel %vm337, %v834, 0
    %934 = vmatpush.msra.mxu0 0.0
    %935 = vmatpush.msra.mxu0 0.0
    %936 = vmatpush.msra.mxu0 0.0
    %937 = vmatpush.msra.mxu0 0.0
    %938 = vmatpush.msra.mxu0 0.0
    %939 = vmatpush.msra.mxu0 0.0
    %940 = vmatpush.msra.mxu0 0.0
    %941 = vmatpush.msra.mxu0 0.0
    %942 = vmatpush.msra.mxu0 0.0
    %943 = vmatpush.msra.mxu0 0.0
    %944 = vmatpush.msra.mxu0 0.0
    %945 = vmatpush.msra.mxu0 0.0
    %946 = vmatpush.msra.mxu0 0.0
    %947 = vmatpush.msra.mxu0 0.0
    %948 = vmatpush.msra.mxu0 %v928
    %949 = vmatpush.msra.mxu0 %v926
    %950 = vmatmul.f32.gmra.mxu0 %v932
    %v951 = vpop.f32.mrf.mxu0
    %v952 = vadd.f32 0.0, %v951
    %953 = vdwg.mxu0
    %954 = vrot.lane.b32.xlu0 %v271, 112
    %v955 = vpop.permute.xlu0 %954
    %956 = vrot.lane.b32.xlu0 %v274, 112
    %v957 = vpop.permute.xlu0 %956
    %v961 = vsel %vm337, %v835, 0
    %963 = vmatpush.msra.mxu0 0.0
    %964 = vmatpush.msra.mxu0 0.0
    %965 = vmatpush.msra.mxu0 0.0
    %966 = vmatpush.msra.mxu0 0.0
    %967 = vmatpush.msra.mxu0 0.0
    %968 = vmatpush.msra.mxu0 0.0
    %969 = vmatpush.msra.mxu0 0.0
    %970 = vmatpush.msra.mxu0 0.0
    %971 = vmatpush.msra.mxu0 0.0
    %972 = vmatpush.msra.mxu0 0.0
    %973 = vmatpush.msra.mxu0 0.0
    %974 = vmatpush.msra.mxu0 0.0
    %975 = vmatpush.msra.mxu0 0.0
    %976 = vmatpush.msra.mxu0 0.0
    %977 = vmatpush.msra.mxu0 %v957
    %978 = vmatpush.msra.mxu0 %v955
    %979 = vmatmul.f32.gmra.mxu0 %v961
    %v980 = vpop.f32.mrf.mxu0
    %v981 = vadd.f32 0.0, %v980
    %982 = vdwg.mxu0
    %985 = vrot.lane.b32.xlu0 %v952, 16
    %v986 = vpop.permute.xlu0 %985
    %987 = vrot.lane.b32.xlu0 %v981, 16
    %v988 = vpop.permute.xlu0 %987
    %vm991 = vcmask 195712
    %992 = vst.msk [vmem:[#allocation13] sm:$0xff] %vm991, %v986
    %993 = vst.msk [vmem:[#allocation13 + $0x8] sm:$0xff] %vm991, %v988
    %994 = vrot.lane.b32.xlu0 %v276, 104
    %v995 = vpop.permute.xlu0 %994
    %996 = vrot.lane.b32.xlu0 %v212, 104
    %v997 = vpop.permute.xlu0 %996
    %998 = vrot.lane.b32.xlu0 %v215, 104
    %v999 = vpop.permute.xlu0 %998
    %v1000 = vsel %vm278, %v995, 0
    %v1002 = vsel %vm278, %v997, 0
    %v1004 = vsel %vm278, %v999, 0
    %1006 = vmatpush.xpose.msra.mxu0 0.0
    %1007 = vmatpush.xpose.msra.mxu0 0.0
    %1008 = vmatpush.xpose.msra.mxu0 0.0
    %1009 = vmatpush.xpose.msra.mxu0 0.0
    %1010 = vmatpush.xpose.msra.mxu0 0.0
    %1011 = vmatpush.xpose.msra.mxu0 0.0
    %1012 = vmatpush.xpose.msra.mxu0 0.0
    %1013 = vmatpush.xpose.msra.mxu0 0.0
    %1014 = vmatpush.xpose.msra.mxu0 0.0
    %1015 = vmatpush.xpose.msra.mxu0 0.0
    %1016 = vmatpush.xpose.msra.mxu0 0.0
    %1017 = vmatpush.xpose.msra.mxu0 0.0
    %1018 = vmatpush.xpose.msra.mxu0 0.0
    %1019 = vmatpush.xpose.msra.mxu0 0.0
    %1020 = vmatpush.xpose.msra.mxu0 %v1004
    %1021 = vmatpush.xpose.msra.mxu0 %v1002
    %1022 = vmatmul.f32.gmra.mxu0 %v1000
    %v1023 = vpop.f32.mrf.mxu0
    %v1024 = vadd.f32 0.0, %v1023
    %1025 = vdwg.mxu0
    %1026 = vrot.lane.b32.xlu0 %v277, 104
    %v1027 = vpop.permute.xlu0 %1026
    %1028 = vrot.lane.b32.xlu0 %v218, 104
    %v1029 = vpop.permute.xlu0 %1028
    %1030 = vrot.lane.b32.xlu0 %v221, 104
    %v1031 = vpop.permute.xlu0 %1030
    %v1032 = vsel %vm278, %v1027, 0
    %v1034 = vsel %vm278, %v1029, 0
    %v1036 = vsel %vm278, %v1031, 0
    %1038 = vmatpush.xpose.msra.mxu0 0.0
    %1039 = vmatpush.xpose.msra.mxu0 0.0
    %1040 = vmatpush.xpose.msra.mxu0 0.0
    %1041 = vmatpush.xpose.msra.mxu0 0.0
    %1042 = vmatpush.xpose.msra.mxu0 0.0
    %1043 = vmatpush.xpose.msra.mxu0 0.0
    %1044 = vmatpush.xpose.msra.mxu0 0.0
    %1045 = vmatpush.xpose.msra.mxu0 0.0
    %1046 = vmatpush.xpose.msra.mxu0 0.0
    %1047 = vmatpush.xpose.msra.mxu0 0.0
    %1048 = vmatpush.xpose.msra.mxu0 0.0
    %1049 = vmatpush.xpose.msra.mxu0 0.0
    %1050 = vmatpush.xpose.msra.mxu0 0.0
    %1051 = vmatpush.xpose.msra.mxu0 0.0
    %1052 = vmatpush.xpose.msra.mxu0 %v1036
    %1053 = vmatpush.xpose.msra.mxu0 %v1034
    %1054 = vmatmul.f32.gmra.mxu0 %v1032
    %v1055 = vpop.f32.mrf.mxu0
    %v1056 = vadd.f32 0.0, %v1055
    %1057 = vdwg.mxu0
    %v1058 = vsel %vm337, %v1024, -inf
    %1059 = vmax.xlane.f32.xlu0 %v1058
    %v1060 = vpop.xlane.xlu0 %1059
    %v1061 = vsel %vm337, %v1056, -inf
    %1062 = vmax.xlane.f32.xlu0 %v1061
    %v1063 = vpop.xlane.xlu0 %1062
    %v1064 = vsub.f32 %v1024, %v1060
    %v1065 = vsub.f32 %v1056, %v1063
    %v1066 = vmul.f32 %v1064, 1.442695
    %v1067 = vpow.pop %v1066
    %v1068 = vmul.f32 %v1065, 1.442695
    %v1069 = vpow.pop %v1068
    %v1070 = vsel %vm337, %v1067, 0.0
    %1071 = vadd.xlane.f32.xlu0 %v1070
    %v1072 = vpop.xlane.xlu0 %1071
    %v1073 = vsel %vm337, %v1069, 0.0
    %1074 = vadd.xlane.f32.xlu0 %v1073
    %v1075 = vpop.xlane.xlu0 %1074
    %v1076 = vrcp.pop %v1072
    %v1077 = vrcp.pop %v1075
    %v1078 = vmul.f32 %v1067, %v1076
    %v1079 = vmul.f32 %v1069, %v1077
    %v1080 = vrot.slane %v1078, 4
    %v1081 = vsel %vm361, 0.0, %v1080
    %v1083 = vunpack.c.l.s4 1983009808
    %v1084 = vunpack.c.0.s8 %v1083
    %v1085 = vperm.slane %v1078, %v1084
    %v1087 = vunpack.c.l.s4 1983009808
    %v1088 = vunpack.c.0.s8 %v1087
    %v1089 = vperm.slane %v1081, %v1088
    %v1090 = vrot.slane %v1079, 4
    %v1091 = vsel %vm361, 0.0, %v1090
    %v1093 = vunpack.c.l.s4 1983009808
    %v1094 = vunpack.c.0.s8 %v1093
    %v1095 = vperm.slane %v1079, %v1094
    %v1097 = vunpack.c.l.s4 1983009808
    %v1098 = vunpack.c.0.s8 %v1097
    %v1099 = vperm.slane %v1091, %v1098
    %v1100 = vrot.slane %v1095, 4
    %v1101 = vsel %vm361, %v1100, %v1085
    %v1102 = vrot.slane %v1085, 4
    %v1103 = vsel %vm361, %v1095, %v1102
    %v1105 = vunpack.c.l.s4 1934713408
    %v1106 = vunpack.c.0.s8 %v1105
    %v1107 = vperm.slane %v1101, %v1106
    %v1109 = vunpack.c.l.s4 1934713408
    %v1110 = vunpack.c.0.s8 %v1109
    %v1111 = vperm.slane %v1103, %v1110
    %v1112 = vrot.slane %v1099, 4
    %v1113 = vsel %vm361, %v1112, %v1089
    %v1114 = vrot.slane %v1089, 4
    %v1115 = vsel %vm361, %v1099, %v1114
    %v1117 = vunpack.c.l.s4 1934713408
    %v1118 = vunpack.c.0.s8 %v1117
    %v1119 = vperm.slane %v1113, %v1118
    %v1121 = vunpack.c.l.s4 1934713408
    %v1122 = vunpack.c.0.s8 %v1121
    %v1123 = vperm.slane %v1115, %v1122
    %v1124 = vrot.slane %v1107, 4
    %v1125 = vsel %vm361, 0.0, %v1124
    %v1126 = vrot.slane %v1111, 4
    %v1127 = vsel %vm361, 0.0, %v1126
    %v1128 = vrot.slane %v1119, 4
    %v1129 = vsel %vm361, 0.0, %v1128
    %v1130 = vrot.slane %v1123, 4
    %v1131 = vsel %vm361, 0.0, %v1130
    %1133 = vrot.lane.b32.xlu0 %v1125, 16
    %v1134 = vpop.permute.xlu0 %1133
    %1137 = vrot.lane.b32.xlu0 %v1111, 32
    %v1138 = vpop.permute.xlu0 %1137
    %1141 = vrot.lane.b32.xlu0 %v1127, 48
    %v1142 = vpop.permute.xlu0 %1141
    %1145 = vrot.lane.b32.xlu0 %v1119, 64
    %v1146 = vpop.permute.xlu0 %1145
    %1149 = vrot.lane.b32.xlu0 %v1129, 80
    %v1150 = vpop.permute.xlu0 %1149
    %1153 = vrot.lane.b32.xlu0 %v1123, 96
    %v1154 = vpop.permute.xlu0 %1153
    %1157 = vrot.lane.b32.xlu0 %v1131, 112
    %v1158 = vpop.permute.xlu0 %1157
    %v1160 = vsel %vm337, %v1107, %v1134
    %v1161 = vsel %vm140, %v1160, %v1138
    %v1162 = vsel %vm443, %v1161, %v1142
    %v1163 = vsel %vm445, %v1162, %v1146
    %v1164 = vsel %vm447, %v1163, %v1150
    %v1165 = vsel %vm449, %v1164, %v1154
    %v1166 = vsel %vm451, %v1165, %v1158
    %s1167 = scalar_lea.vmem [#allocation14], 6
    %1168 = vst [vmem:[%s1167] sm:$0x3] %v1166
    %1169 = vrot.lane.b32.xlu0 %v265, 104
    %v1170 = vpop.permute.xlu0 %1169
    %1171 = vrot.lane.b32.xlu0 %v268, 104
    %v1172 = vpop.permute.xlu0 %1171
    %v1176 = vsel %vm337, %v1078, 0
    %1178 = vmatpush.msra.mxu0 0.0
    %1179 = vmatpush.msra.mxu0 0.0
    %1180 = vmatpush.msra.mxu0 0.0
    %1181 = vmatpush.msra.mxu0 0.0
    %1182 = vmatpush.msra.mxu0 0.0
    %1183 = vmatpush.msra.mxu0 0.0
    %1184 = vmatpush.msra.mxu0 0.0
    %1185 = vmatpush.msra.mxu0 0.0
    %1186 = vmatpush.msra.mxu0 0.0
    %1187 = vmatpush.msra.mxu0 0.0
    %1188 = vmatpush.msra.mxu0 0.0
    %1189 = vmatpush.msra.mxu0 0.0
    %1190 = vmatpush.msra.mxu0 0.0
    %1191 = vmatpush.msra.mxu0 0.0
    %1192 = vmatpush.msra.mxu0 %v1172
    %1193 = vmatpush.msra.mxu0 %v1170
    %1194 = vmatmul.f32.gmra.mxu0 %v1176
    %v1195 = vpop.f32.mrf.mxu0
    %v1196 = vadd.f32 0.0, %v1195
    %1197 = vdwg.mxu0
    %1198 = vrot.lane.b32.xlu0 %v271, 104
    %v1199 = vpop.permute.xlu0 %1198
    %1200 = vrot.lane.b32.xlu0 %v274, 104
    %v1201 = vpop.permute.xlu0 %1200
    %v1205 = vsel %vm337, %v1079, 0
    %1207 = vmatpush.msra.mxu0 0.0
    %1208 = vmatpush.msra.mxu0 0.0
    %1209 = vmatpush.msra.mxu0 0.0
    %1210 = vmatpush.msra.mxu0 0.0
    %1211 = vmatpush.msra.mxu0 0.0
    %1212 = vmatpush.msra.mxu0 0.0
    %1213 = vmatpush.msra.mxu0 0.0
    %1214 = vmatpush.msra.mxu0 0.0
    %1215 = vmatpush.msra.mxu0 0.0
    %1216 = vmatpush.msra.mxu0 0.0
    %1217 = vmatpush.msra.mxu0 0.0
    %1218 = vmatpush.msra.mxu0 0.0
    %1219 = vmatpush.msra.mxu0 0.0
    %1220 = vmatpush.msra.mxu0 0.0
    %1221 = vmatpush.msra.mxu0 %v1201
    %1222 = vmatpush.msra.mxu0 %v1199
    %1223 = vmatmul.f32.gmra.mxu0 %v1205
    %v1224 = vpop.f32.mrf.mxu0
    %v1225 = vadd.f32 0.0, %v1224
    %1226 = vdwg.mxu0
    %1229 = vrot.lane.b32.xlu0 %v1196, 24
    %v1230 = vpop.permute.xlu0 %1229
    %1231 = vrot.lane.b32.xlu0 %v1225, 24
    %v1232 = vpop.permute.xlu0 %1231
    %vm1235 = vcmask 261312
    %1236 = vst.msk [vmem:[#allocation13] sm:$0xff] %vm1235, %v1230
    %1237 = vst.msk [vmem:[#allocation13 + $0x8] sm:$0xff] %vm1235, %v1232
    // Predicated region
    $region62: #{tpu_custom_call.1} parent=1 // pred_check
      _
    $region63: #{tpu_custom_call.1} parent=1 // pred_check_branch
      %1239 = sbr.rel (0) target = $region65
    $region64: #{tpu_custom_call.1} parent=1 // pred_region
      %1241 = vsyncadd [#allocation4], 0
      %s1242 = sshll.u32 [#allocation13], 4
      %s1243 = int_to_ptr.vmem [resolvable:$true] %s1242
      %s1244 = sshll.u32 %s9, 4
      %s1245 = int_to_ptr.hbm [resolvable:$true] %s1244
      %1250 = dma.vmem_to_hbm [thread:$0]  %s1243, 256, %s1245, [#allocation4], 128, 128, 8
    $region65: #{tpu_custom_call.1} parent=1 // pred_fallthru
      _
    // Predicated region
    $region66: #{tpu_custom_call.1} parent=1 // pred_check
      _
    $region67: #{tpu_custom_call.1} parent=1 // pred_check_branch
      %1252 = sbr.rel (0) target = $region69
    $region68: #{tpu_custom_call.1} parent=1 // pred_region
      %1254 = vsyncadd [#allocation15], 0
      %s1255 = sshll.u32 [#allocation14], 4
      %s1256 = int_to_ptr.vmem [resolvable:$true] %s1255
      %s1257 = sshll.u32 %s10, 4
      %s1258 = int_to_ptr.hbm [resolvable:$true] %s1257
      %1263 = dma.vmem_to_hbm [thread:$0]  %s1256, 128, %s1258, [#allocation15], 32, 32, 2
    $region69: #{tpu_custom_call.1} parent=1 // pred_fallthru
      _
    // Predicated region
    $region70: #{tpu_custom_call.1} parent=1 // pred_check
      _
    $region71: #{tpu_custom_call.1} parent=1 // pred_check_branch
      %1265 = sbr.rel (0) target = $region73
    $region72: #{tpu_custom_call.1} parent=1 // pred_region
      %1267 = dma.done [#allocation4], 256
    $region73: #{tpu_custom_call.1} parent=1 // pred_fallthru
      _
    // Predicated region
    $region74: #{tpu_custom_call.1} parent=1 // pred_check
      _
    $region75: #{tpu_custom_call.1} parent=1 // pred_check_branch
      %1269 = sbr.rel (0) target = $region77
    $region76: #{tpu_custom_call.1} parent=1 // pred_region
      %1271 = dma.done [#allocation15], 128
    $region77: #{tpu_custom_call.1} parent=1 // pred_fallthru
      _
    %1272 = vsyncpa [#allocation3], 1
    %1273 = vsyncpa [#allocation6], 1
    %1274 = vsyncpa [#allocation9], 1
    %1275 = vsyncpa [#allocation12], 1
    %1276 = vsyncpa [#allocation4], 1
    %1277 = vsyncpa [#allocation15], 1

</llo_original>
